<compile_context>
chip_gen: v7x
topology: tpu7x:2x2x1
jax: 0.10.0
libtpu: 0.0.40
codegen_flags: <defaults>
</compile_context>

<pallas_src>
import functools

import jax
import jax.numpy as jnp
from jax import lax
from jax.experimental import pallas as pl
from jax.experimental.pallas import tpu as pltpu


def _attribution_kernel(x_ref, w_ref, b_ref, o_ref, acc_ref, *,
                        target_class, cutoff, inv_hw, hw, thw, chunk,
                        blocks_per_split, needs_tail_mask, compute_dtype):
    # x_ref  : (C_in, TN, THW)      VMEM   channel-major input tile
    # w_ref  : (C_out, C_in)        SMEM   1x1-conv weight (scalar reads)
    # b_ref  : (C_out,)             SMEM   bias
    # o_ref  : (1, TN, C_out)       VMEM   partial (per HW-split) masked means
    # acc_ref: (C_out, TN, chunk)   VMEM   f32 lane-partial masked sums
    c_in, tn, _ = x_ref.shape
    c_out = o_ref.shape[2]
    n_chunks = thw // chunk

    s_i = pl.program_id(0)       # HW split (v7x occupancy axis)
    hw_i = pl.program_id(2)      # HW block within this split (reduction axis)

    @pl.when(hw_i == 0)
    def _init():
        acc_ref[...] = jnp.zeros_like(acc_ref)

    # Scalar weights / bias splatted from SMEM, hoisted out of the chunk loop.
    w_sc = [[w_ref[o, c].astype(compute_dtype) for c in range(c_in)]
            for o in range(c_out)]
    b_sc = [b_ref[o].astype(compute_dtype) for o in range(c_out)]

    block_start = (s_i * blocks_per_split + hw_i) * thw
    one_c = jnp.asarray(1.0, dtype=compute_dtype)
    cutoff_c = jnp.asarray(cutoff, dtype=compute_dtype)

    def body(j, accs):
        off = pl.multiple_of(j * chunk, chunk)
        # One vreg-sized slab per input channel: (TN, chunk), lane-aligned.
        xs = [x_ref[c, :, pl.ds(off, chunk)].astype(compute_dtype)
              for c in range(c_in)]

        # model(x): pointwise 1x1 conv, output channels unrolled in registers.
        ys = []
        for o in range(c_out):
            y = xs[0] * w_sc[o][0]
            for c in range(1, c_in):
                y = y + xs[c] * w_sc[o][c]
            ys.append(y + b_sc[o])

        # no-grad mask:  softmax(y)[target] > cutoff
        #            <=> cutoff * sum_c exp(y_c - y_target) < 1
        # (exp overflow -> inf -> condition False, matching p_t ~ 0 < cutoff)
        y_t = ys[target_class]
        s = jnp.ones_like(y_t)                      # exp(y_t - y_t) == 1
        for o in range(c_out):
            if o == target_class:
                continue
            s = s + jnp.exp(ys[o] - y_t)
        cond = (cutoff_c * s) < one_c

        if needs_tail_mask:
            lane = lax.broadcasted_iota(jnp.int32, (tn, chunk), 1)
            cond = jnp.logical_and(cond, lane < (hw - (block_start + off)))

        # Masked accumulate (select, so garbage/NaN in padded tails never
        # leaks into the sum); accumulation stays in f32 vregs.
        return tuple(acc + jnp.where(cond, y, 0).astype(jnp.float32)
                     for acc, y in zip(accs, ys))

    init = tuple(jnp.zeros((tn, chunk), jnp.float32) for _ in range(c_out))
    accs = lax.fori_loop(0, n_chunks, body, init, unroll=min(8, n_chunks))

    # Fold this HW block's lane-partial sums into the resident VMEM scratch
    # (contiguous (TN, chunk) tile per channel -> clean loads/stores).
    for o in range(c_out):
        acc_ref[o] = acc_ref[o] + accs[o]

    @pl.when(hw_i == pl.num_programs(2) - 1)
    def _finalize():
        # Single cross-lane reduce per batch tile; tiny per-column stores.
        for o in range(c_out):
            col = jnp.sum(acc_ref[o], axis=-1, keepdims=True) * inv_hw
            o_ref[0, :, o:o + 1] = col.astype(o_ref.dtype)


def attribution_limit_forward(x_nchw, w, b, *, target_class, cutoff_score,
                              max_hw_block=16384, compute_dtype=jnp.float32):
    """AttributionLimitToTargetClassWrapper(model).forward(x), model = 1x1 conv.

    compute_dtype=jnp.bfloat16 is a valid choice on v6e/v7x (accumulation
    stays f32); keep the default f32 on v5e.
    """
    N, C_in, H, W = x_nchw.shape
    C_out = w.shape[0]
    HW = H * W

    # Channel-major, lane-dense layout: (C_in, N, H*W). The N/HW flatten is
    # free; the (N, C_in) swap is one-time layout plumbing done by XLA.
    x_cnl = jnp.transpose(x_nchw.reshape(N, C_in, HW), (1, 0, 2))

    # --- tile selection ---------------------------------------------------
    # Batch tile: block sublane dim must be a multiple of 8 or the full N.
    tn = 8 if N % 8 == 0 else N

    # Spatial tile: multiple of 128 (or the full HW when HW < 128), capped,
    # and guarded so the double-buffered x window stays well inside VMEM on
    # every TPU generation (incl. v7x's 64 MiB).
    thw = min(HW, max_hw_block)
    if thw >= 128:
        thw -= thw % 128
    itemsize = jnp.dtype(x_nchw.dtype).itemsize
    while thw > 128 and C_in * tn * thw * itemsize * 2 > 16 * 1024 * 1024:
        thw = max(128, (thw // 2) // 128 * 128)

    chunk = 128 if thw >= 128 else thw
    hw_blocks = pl.cdiv(HW, thw)

    # v7x has 2 TensorCores; only leading "parallel" axes shard across them.
    # If the batch axis cannot give >= 2 parallel entries, split the HW blocks
    # into two independent halves and sum the partial results in the wrapper.
    n_splits = 2 if ((N // tn) < 2 and hw_blocks >= 2 and hw_blocks % 2 == 0) else 1
    bps = hw_blocks // n_splits
    needs_tail_mask = (hw_blocks * thw != HW)

    grid = (n_splits, N // tn, bps)

    kernel = functools.partial(
        _attribution_kernel,
        target_class=int(target_class),
        cutoff=float(cutoff_score),
        inv_hw=1.0 / float(HW),
        hw=HW, thw=thw, chunk=chunk,
        blocks_per_split=bps,
        needs_tail_mask=needs_tail_mask,
        compute_dtype=compute_dtype)

    partials = pl.pallas_call(
        kernel,
        out_shape=jax.ShapeDtypeStruct((n_splits, N, C_out), jnp.float32),
        grid_spec=pltpu.PrefetchScalarGridSpec(
            num_scalar_prefetch=0,
            grid=grid,
            in_specs=[
                pl.BlockSpec((C_in, tn, thw),
                             lambda s, n, h: (0, n, s * bps + h)),
                pl.BlockSpec(memory_space=pltpu.MemorySpace.SMEM),   # w
                pl.BlockSpec(memory_space=pltpu.MemorySpace.SMEM),   # b
            ],
            out_specs=pl.BlockSpec((1, tn, C_out), lambda s, n, h: (s, n, 0)),
            scratch_shapes=[pltpu.VMEM((C_out, tn, chunk), jnp.float32)],
        ),
        compiler_params=pltpu.CompilerParams(
            dimension_semantics=("parallel", "parallel", "arbitrary"),
            vmem_limit_bytes=32 * 1024 * 1024,
        ),
    )(x_cnl, w.astype(jnp.float32), b.astype(jnp.float32))

    return jnp.sum(partials, axis=0).astype(x_nchw.dtype)


if __name__ == "__main__":
    N, C_in, H, W = 2, 4, 16, 16
    C_out = 8
    target_class = 3
    cutoff_score = 0.25   # chosen so the synthetic example produces a mixed mask

    key = jax.random.PRNGKey(0)
    kx, kw, kb = jax.random.split(key, 3)
    x = jax.random.normal(kx, (N, C_in, H, W), dtype=jnp.float32)
    w = jax.random.normal(kw, (C_out, C_in), dtype=jnp.float32)
    b = 0.1 * jax.random.normal(kb, (C_out,), dtype=jnp.float32)

    out = attribution_limit_forward(
        x, w, b, target_class=target_class, cutoff_score=cutoff_score)
    out = jax.block_until_ready(out)

    # Pure-JAX reference of the PyTorch module with model = 1x1 conv (NCHW).
    logits = jnp.einsum("oc,nchw->nohw", w, x) + b[None, :, None, None]
    p_t = jax.nn.softmax(logits, axis=1)[:, target_class]          # (N, H, W)
    mask = jnp.where(p_t - cutoff_score > 0.0, 1.0, 0.0)           # (N, H, W)
    ref = jnp.mean(logits * mask[:, None, :, :], axis=(2, 3))      # (N, C_out)

    assert out.shape == (N, C_out), out.shape
    assert jnp.allclose(out, ref, atol=1e-5, rtol=1e-5), (out, ref)
    print("KERNEL_OK")
</pallas_src>

<mosaic_0001>
module attributes {stable_mosaic.version = 11 : i64} {
  func.func @_attribution_kernel(%arg0: i32, %arg1: i32, %arg2: i32, %arg3: memref<4x2x256xf32, #tpu.memory_space<vmem>>, %arg4: memref<8x4xf32, #tpu.memory_space<smem>>, %arg5: memref<8xf32, #tpu.memory_space<smem>>, %arg6: memref<1x2x8xf32, #tpu.memory_space<vmem>>, %arg7: memref<8x2x128xf32, #tpu.memory_space<vmem>>) attributes {dimension_semantics = [#tpu.dimension_semantics<parallel>, #tpu.dimension_semantics<parallel>, #tpu.dimension_semantics<arbitrary>], iteration_bounds = array<i64: 1, 1, 1>, scalar_prefetch = 0 : i64, scratch_operands = 1 : i64, tpu.core_type = #tpu.core_type<tc>, window_params = [{transform_indices = @transform_0, window_bounds = array<i64: 4, 2, 256>}, {transform_indices = @transform_1, window_bounds = array<i64: 8, 4>}, {transform_indices = @transform_2, window_bounds = array<i64: 8>}, {transform_indices = @transform_3, window_bounds = array<i64: 1, 2, 8>}]} {
    %c0_i32 = arith.constant 0 : i32
    %0 = arith.cmpi eq, %arg2, %c0_i32 : i32
    %1 = arith.extui %0 : i1 to i32
    %c0_i32_0 = arith.constant 0 : i32
    %2 = arith.cmpi ne, %1, %c0_i32_0 : i32
    scf.if %2 {
      %cst_160 = arith.constant 0.000000e+00 : f32
      %454 = vector.broadcast %cst_160 : f32 to vector<8x2x128xf32>
      %c0_161 = arith.constant 0 : index
      %c0_162 = arith.constant 0 : index
      %c0_163 = arith.constant 0 : index
      %455 = vector.load %arg7[%c0_161, %c0_162, %c0_163] : memref<8x2x128xf32, #tpu.memory_space<vmem>>, vector<8x2x128xf32>
      tpu.vector_store %arg7[%c0_161, %c0_162, %c0_163], %454 {strides = array<i32>} : memref<8x2x128xf32, #tpu.memory_space<vmem>>, vector<8x2x128xf32>,
    } else {
    }
    %c0 = arith.constant 0 : index
    %c0_1 = arith.constant 0 : index
    %3 = memref.load %arg4[%c0, %c0_1] : memref<8x4xf32, #tpu.memory_space<smem>>
    %c0_2 = arith.constant 0 : index
    %c1 = arith.constant 1 : index
    %4 = memref.load %arg4[%c0_2, %c1] : memref<8x4xf32, #tpu.memory_space<smem>>
    %c0_3 = arith.constant 0 : index
    %c2 = arith.constant 2 : index
    %5 = memref.load %arg4[%c0_3, %c2] : memref<8x4xf32, #tpu.memory_space<smem>>
    %c0_4 = arith.constant 0 : index
    %c3 = arith.constant 3 : index
    %6 = memref.load %arg4[%c0_4, %c3] : memref<8x4xf32, #tpu.memory_space<smem>>
    %c1_5 = arith.constant 1 : index
    %c0_6 = arith.constant 0 : index
    %7 = memref.load %arg4[%c1_5, %c0_6] : memref<8x4xf32, #tpu.memory_space<smem>>
    %c1_7 = arith.constant 1 : index
    %c1_8 = arith.constant 1 : index
    %8 = memref.load %arg4[%c1_7, %c1_8] : memref<8x4xf32, #tpu.memory_space<smem>>
    %c1_9 = arith.constant 1 : index
    %c2_10 = arith.constant 2 : index
    %9 = memref.load %arg4[%c1_9, %c2_10] : memref<8x4xf32, #tpu.memory_space<smem>>
    %c1_11 = arith.constant 1 : index
    %c3_12 = arith.constant 3 : index
    %10 = memref.load %arg4[%c1_11, %c3_12] : memref<8x4xf32, #tpu.memory_space<smem>>
    %c2_13 = arith.constant 2 : index
    %c0_14 = arith.constant 0 : index
    %11 = memref.load %arg4[%c2_13, %c0_14] : memref<8x4xf32, #tpu.memory_space<smem>>
    %c2_15 = arith.constant 2 : index
    %c1_16 = arith.constant 1 : index
    %12 = memref.load %arg4[%c2_15, %c1_16] : memref<8x4xf32, #tpu.memory_space<smem>>
    %c2_17 = arith.constant 2 : index
    %c2_18 = arith.constant 2 : index
    %13 = memref.load %arg4[%c2_17, %c2_18] : memref<8x4xf32, #tpu.memory_space<smem>>
    %c2_19 = arith.constant 2 : index
    %c3_20 = arith.constant 3 : index
    %14 = memref.load %arg4[%c2_19, %c3_20] : memref<8x4xf32, #tpu.memory_space<smem>>
    %c3_21 = arith.constant 3 : index
    %c0_22 = arith.constant 0 : index
    %15 = memref.load %arg4[%c3_21, %c0_22] : memref<8x4xf32, #tpu.memory_space<smem>>
    %c3_23 = arith.constant 3 : index
    %c1_24 = arith.constant 1 : index
    %16 = memref.load %arg4[%c3_23, %c1_24] : memref<8x4xf32, #tpu.memory_space<smem>>
    %c3_25 = arith.constant 3 : index
    %c2_26 = arith.constant 2 : index
    %17 = memref.load %arg4[%c3_25, %c2_26] : memref<8x4xf32, #tpu.memory_space<smem>>
    %c3_27 = arith.constant 3 : index
    %c3_28 = arith.constant 3 : index
    %18 = memref.load %arg4[%c3_27, %c3_28] : memref<8x4xf32, #tpu.memory_space<smem>>
    %c4 = arith.constant 4 : index
    %c0_29 = arith.constant 0 : index
    %19 = memref.load %arg4[%c4, %c0_29] : memref<8x4xf32, #tpu.memory_space<smem>>
    %c4_30 = arith.constant 4 : index
    %c1_31 = arith.constant 1 : index
    %20 = memref.load %arg4[%c4_30, %c1_31] : memref<8x4xf32, #tpu.memory_space<smem>>
    %c4_32 = arith.constant 4 : index
    %c2_33 = arith.constant 2 : index
    %21 = memref.load %arg4[%c4_32, %c2_33] : memref<8x4xf32, #tpu.memory_space<smem>>
    %c4_34 = arith.constant 4 : index
    %c3_35 = arith.constant 3 : index
    %22 = memref.load %arg4[%c4_34, %c3_35] : memref<8x4xf32, #tpu.memory_space<smem>>
    %c5 = arith.constant 5 : index
    %c0_36 = arith.constant 0 : index
    %23 = memref.load %arg4[%c5, %c0_36] : memref<8x4xf32, #tpu.memory_space<smem>>
    %c5_37 = arith.constant 5 : index
    %c1_38 = arith.constant 1 : index
    %24 = memref.load %arg4[%c5_37, %c1_38] : memref<8x4xf32, #tpu.memory_space<smem>>
    %c5_39 = arith.constant 5 : index
    %c2_40 = arith.constant 2 : index
    %25 = memref.load %arg4[%c5_39, %c2_40] : memref<8x4xf32, #tpu.memory_space<smem>>
    %c5_41 = arith.constant 5 : index
    %c3_42 = arith.constant 3 : index
    %26 = memref.load %arg4[%c5_41, %c3_42] : memref<8x4xf32, #tpu.memory_space<smem>>
    %c6 = arith.constant 6 : index
    %c0_43 = arith.constant 0 : index
    %27 = memref.load %arg4[%c6, %c0_43] : memref<8x4xf32, #tpu.memory_space<smem>>
    %c6_44 = arith.constant 6 : index
    %c1_45 = arith.constant 1 : index
    %28 = memref.load %arg4[%c6_44, %c1_45] : memref<8x4xf32, #tpu.memory_space<smem>>
    %c6_46 = arith.constant 6 : index
    %c2_47 = arith.constant 2 : index
    %29 = memref.load %arg4[%c6_46, %c2_47] : memref<8x4xf32, #tpu.memory_space<smem>>
    %c6_48 = arith.constant 6 : index
    %c3_49 = arith.constant 3 : index
    %30 = memref.load %arg4[%c6_48, %c3_49] : memref<8x4xf32, #tpu.memory_space<smem>>
    %c7 = arith.constant 7 : index
    %c0_50 = arith.constant 0 : index
    %31 = memref.load %arg4[%c7, %c0_50] : memref<8x4xf32, #tpu.memory_space<smem>>
    %c7_51 = arith.constant 7 : index
    %c1_52 = arith.constant 1 : index
    %32 = memref.load %arg4[%c7_51, %c1_52] : memref<8x4xf32, #tpu.memory_space<smem>>
    %c7_53 = arith.constant 7 : index
    %c2_54 = arith.constant 2 : index
    %33 = memref.load %arg4[%c7_53, %c2_54] : memref<8x4xf32, #tpu.memory_space<smem>>
    %c7_55 = arith.constant 7 : index
    %c3_56 = arith.constant 3 : index
    %34 = memref.load %arg4[%c7_55, %c3_56] : memref<8x4xf32, #tpu.memory_space<smem>>
    %c0_57 = arith.constant 0 : index
    %35 = memref.load %arg5[%c0_57] : memref<8xf32, #tpu.memory_space<smem>>
    %c1_58 = arith.constant 1 : index
    %36 = memref.load %arg5[%c1_58] : memref<8xf32, #tpu.memory_space<smem>>
    %c2_59 = arith.constant 2 : index
    %37 = memref.load %arg5[%c2_59] : memref<8xf32, #tpu.memory_space<smem>>
    %c3_60 = arith.constant 3 : index
    %38 = memref.load %arg5[%c3_60] : memref<8xf32, #tpu.memory_space<smem>>
    %c4_61 = arith.constant 4 : index
    %39 = memref.load %arg5[%c4_61] : memref<8xf32, #tpu.memory_space<smem>>
    %c5_62 = arith.constant 5 : index
    %40 = memref.load %arg5[%c5_62] : memref<8xf32, #tpu.memory_space<smem>>
    %c6_63 = arith.constant 6 : index
    %41 = memref.load %arg5[%c6_63] : memref<8xf32, #tpu.memory_space<smem>>
    %c7_64 = arith.constant 7 : index
    %42 = memref.load %arg5[%c7_64] : memref<8xf32, #tpu.memory_space<smem>>
    %cst = arith.constant 0.000000e+00 : f32
    %43 = vector.broadcast %cst : f32 to vector<2x128xf32>
    %cst_65 = arith.constant 0.000000e+00 : f32
    %44 = vector.broadcast %cst_65 : f32 to vector<2x128xf32>
    %cst_66 = arith.constant 0.000000e+00 : f32
    %45 = vector.broadcast %cst_66 : f32 to vector<2x128xf32>
    %cst_67 = arith.constant 0.000000e+00 : f32
    %46 = vector.broadcast %cst_67 : f32 to vector<2x128xf32>
    %cst_68 = arith.constant 0.000000e+00 : f32
    %47 = vector.broadcast %cst_68 : f32 to vector<2x128xf32>
    %cst_69 = arith.constant 0.000000e+00 : f32
    %48 = vector.broadcast %cst_69 : f32 to vector<2x128xf32>
    %cst_70 = arith.constant 0.000000e+00 : f32
    %49 = vector.broadcast %cst_70 : f32 to vector<2x128xf32>
    %cst_71 = arith.constant 0.000000e+00 : f32
    %50 = vector.broadcast %cst_71 : f32 to vector<2x128xf32>
    %cst_72 = arith.constant 2.500000e-01 : f32
    %cst_73 = arith.constant 1.000000e+00 : f32
    %c0_i32_74 = arith.constant 0 : i32
    %c128_i32 = arith.constant 128 : i32
    %51 = arith.muli %c0_i32_74, %c128_i32 : i32
    %52 = tpu.assume_multiple %51, 128 : i32
    %c0_75 = arith.constant 0 : index
    %c0_76 = arith.constant 0 : index
    %53 = arith.index_cast %52 : i32 to index
    %54 = vector.load %arg3[%c0_75, %c0_76, %53] : memref<4x2x256xf32, #tpu.memory_space<vmem>>, vector<1x2x128xf32>
    %55 = vector.shape_cast %54 : vector<1x2x128xf32> to vector<2x128xf32>
    %c1_77 = arith.constant 1 : index
    %c0_78 = arith.constant 0 : index
    %56 = arith.index_cast %52 : i32 to index
    %57 = vector.load %arg3[%c1_77, %c0_78, %56] : memref<4x2x256xf32, #tpu.memory_space<vmem>>, vector<1x2x128xf32>
    %58 = vector.shape_cast %57 : vector<1x2x128xf32> to vector<2x128xf32>
    %c2_79 = arith.constant 2 : index
    %c0_80 = arith.constant 0 : index
    %59 = arith.index_cast %52 : i32 to index
    %60 = vector.load %arg3[%c2_79, %c0_80, %59] : memref<4x2x256xf32, #tpu.memory_space<vmem>>, vector<1x2x128xf32>
    %61 = vector.shape_cast %60 : vector<1x2x128xf32> to vector<2x128xf32>
    %c3_81 = arith.constant 3 : index
    %c0_82 = arith.constant 0 : index
    %62 = arith.index_cast %52 : i32 to index
    %63 = vector.load %arg3[%c3_81, %c0_82, %62] : memref<4x2x256xf32, #tpu.memory_space<vmem>>, vector<1x2x128xf32>
    %64 = vector.shape_cast %63 : vector<1x2x128xf32> to vector<2x128xf32>
    %65 = vector.broadcast %3 : f32 to vector<2x128xf32>
    %66 = arith.mulf %55, %65 : vector<2x128xf32>
    %67 = vector.broadcast %4 : f32 to vector<2x128xf32>
    %68 = arith.mulf %58, %67 : vector<2x128xf32>
    %69 = arith.addf %66, %68 : vector<2x128xf32>
    %70 = vector.broadcast %5 : f32 to vector<2x128xf32>
    %71 = arith.mulf %61, %70 : vector<2x128xf32>
    %72 = arith.addf %69, %71 : vector<2x128xf32>
    %73 = vector.broadcast %6 : f32 to vector<2x128xf32>
    %74 = arith.mulf %64, %73 : vector<2x128xf32>
    %75 = arith.addf %72, %74 : vector<2x128xf32>
    %76 = vector.broadcast %35 : f32 to vector<2x128xf32>
    %77 = arith.addf %75, %76 : vector<2x128xf32>
    %78 = vector.broadcast %7 : f32 to vector<2x128xf32>
    %79 = arith.mulf %55, %78 : vector<2x128xf32>
    %80 = vector.broadcast %8 : f32 to vector<2x128xf32>
    %81 = arith.mulf %58, %80 : vector<2x128xf32>
    %82 = arith.addf %79, %81 : vector<2x128xf32>
    %83 = vector.broadcast %9 : f32 to vector<2x128xf32>
    %84 = arith.mulf %61, %83 : vector<2x128xf32>
    %85 = arith.addf %82, %84 : vector<2x128xf32>
    %86 = vector.broadcast %10 : f32 to vector<2x128xf32>
    %87 = arith.mulf %64, %86 : vector<2x128xf32>
    %88 = arith.addf %85, %87 : vector<2x128xf32>
    %89 = vector.broadcast %36 : f32 to vector<2x128xf32>
    %90 = arith.addf %88, %89 : vector<2x128xf32>
    %91 = vector.broadcast %11 : f32 to vector<2x128xf32>
    %92 = arith.mulf %55, %91 : vector<2x128xf32>
    %93 = vector.broadcast %12 : f32 to vector<2x128xf32>
    %94 = arith.mulf %58, %93 : vector<2x128xf32>
    %95 = arith.addf %92, %94 : vector<2x128xf32>
    %96 = vector.broadcast %13 : f32 to vector<2x128xf32>
    %97 = arith.mulf %61, %96 : vector<2x128xf32>
    %98 = arith.addf %95, %97 : vector<2x128xf32>
    %99 = vector.broadcast %14 : f32 to vector<2x128xf32>
    %100 = arith.mulf %64, %99 : vector<2x128xf32>
    %101 = arith.addf %98, %100 : vector<2x128xf32>
    %102 = vector.broadcast %37 : f32 to vector<2x128xf32>
    %103 = arith.addf %101, %102 : vector<2x128xf32>
    %104 = vector.broadcast %15 : f32 to vector<2x128xf32>
    %105 = arith.mulf %55, %104 : vector<2x128xf32>
    %106 = vector.broadcast %16 : f32 to vector<2x128xf32>
    %107 = arith.mulf %58, %106 : vector<2x128xf32>
    %108 = arith.addf %105, %107 : vector<2x128xf32>
    %109 = vector.broadcast %17 : f32 to vector<2x128xf32>
    %110 = arith.mulf %61, %109 : vector<2x128xf32>
    %111 = arith.addf %108, %110 : vector<2x128xf32>
    %112 = vector.broadcast %18 : f32 to vector<2x128xf32>
    %113 = arith.mulf %64, %112 : vector<2x128xf32>
    %114 = arith.addf %111, %113 : vector<2x128xf32>
    %115 = vector.broadcast %38 : f32 to vector<2x128xf32>
    %116 = arith.addf %114, %115 : vector<2x128xf32>
    %117 = vector.broadcast %19 : f32 to vector<2x128xf32>
    %118 = arith.mulf %55, %117 : vector<2x128xf32>
    %119 = vector.broadcast %20 : f32 to vector<2x128xf32>
    %120 = arith.mulf %58, %119 : vector<2x128xf32>
    %121 = arith.addf %118, %120 : vector<2x128xf32>
    %122 = vector.broadcast %21 : f32 to vector<2x128xf32>
    %123 = arith.mulf %61, %122 : vector<2x128xf32>
    %124 = arith.addf %121, %123 : vector<2x128xf32>
    %125 = vector.broadcast %22 : f32 to vector<2x128xf32>
    %126 = arith.mulf %64, %125 : vector<2x128xf32>
    %127 = arith.addf %124, %126 : vector<2x128xf32>
    %128 = vector.broadcast %39 : f32 to vector<2x128xf32>
    %129 = arith.addf %127, %128 : vector<2x128xf32>
    %130 = vector.broadcast %23 : f32 to vector<2x128xf32>
    %131 = arith.mulf %55, %130 : vector<2x128xf32>
    %132 = vector.broadcast %24 : f32 to vector<2x128xf32>
    %133 = arith.mulf %58, %132 : vector<2x128xf32>
    %134 = arith.addf %131, %133 : vector<2x128xf32>
    %135 = vector.broadcast %25 : f32 to vector<2x128xf32>
    %136 = arith.mulf %61, %135 : vector<2x128xf32>
    %137 = arith.addf %134, %136 : vector<2x128xf32>
    %138 = vector.broadcast %26 : f32 to vector<2x128xf32>
    %139 = arith.mulf %64, %138 : vector<2x128xf32>
    %140 = arith.addf %137, %139 : vector<2x128xf32>
    %141 = vector.broadcast %40 : f32 to vector<2x128xf32>
    %142 = arith.addf %140, %141 : vector<2x128xf32>
    %143 = vector.broadcast %27 : f32 to vector<2x128xf32>
    %144 = arith.mulf %55, %143 : vector<2x128xf32>
    %145 = vector.broadcast %28 : f32 to vector<2x128xf32>
    %146 = arith.mulf %58, %145 : vector<2x128xf32>
    %147 = arith.addf %144, %146 : vector<2x128xf32>
    %148 = vector.broadcast %29 : f32 to vector<2x128xf32>
    %149 = arith.mulf %61, %148 : vector<2x128xf32>
    %150 = arith.addf %147, %149 : vector<2x128xf32>
    %151 = vector.broadcast %30 : f32 to vector<2x128xf32>
    %152 = arith.mulf %64, %151 : vector<2x128xf32>
    %153 = arith.addf %150, %152 : vector<2x128xf32>
    %154 = vector.broadcast %41 : f32 to vector<2x128xf32>
    %155 = arith.addf %153, %154 : vector<2x128xf32>
    %156 = vector.broadcast %31 : f32 to vector<2x128xf32>
    %157 = arith.mulf %55, %156 : vector<2x128xf32>
    %158 = vector.broadcast %32 : f32 to vector<2x128xf32>
    %159 = arith.mulf %58, %158 : vector<2x128xf32>
    %160 = arith.addf %157, %159 : vector<2x128xf32>
    %161 = vector.broadcast %33 : f32 to vector<2x128xf32>
    %162 = arith.mulf %61, %161 : vector<2x128xf32>
    %163 = arith.addf %160, %162 : vector<2x128xf32>
    %164 = vector.broadcast %34 : f32 to vector<2x128xf32>
    %165 = arith.mulf %64, %164 : vector<2x128xf32>
    %166 = arith.addf %163, %165 : vector<2x128xf32>
    %167 = vector.broadcast %42 : f32 to vector<2x128xf32>
    %168 = arith.addf %166, %167 : vector<2x128xf32>
    %cst_83 = arith.constant 1.000000e+00 : f32
    %169 = vector.broadcast %cst_83 : f32 to vector<2x128xf32>
    %170 = arith.subf %77, %116 : vector<2x128xf32>
    %171 = math.exp %170 : vector<2x128xf32>
    %172 = arith.addf %169, %171 : vector<2x128xf32>
    %173 = arith.subf %90, %116 : vector<2x128xf32>
    %174 = math.exp %173 : vector<2x128xf32>
    %175 = arith.addf %172, %174 : vector<2x128xf32>
    %176 = arith.subf %103, %116 : vector<2x128xf32>
    %177 = math.exp %176 : vector<2x128xf32>
    %178 = arith.addf %175, %177 : vector<2x128xf32>
    %179 = arith.subf %129, %116 : vector<2x128xf32>
    %180 = math.exp %179 : vector<2x128xf32>
    %181 = arith.addf %178, %180 : vector<2x128xf32>
    %182 = arith.subf %142, %116 : vector<2x128xf32>
    %183 = math.exp %182 : vector<2x128xf32>
    %184 = arith.addf %181, %183 : vector<2x128xf32>
    %185 = arith.subf %155, %116 : vector<2x128xf32>
    %186 = math.exp %185 : vector<2x128xf32>
    %187 = arith.addf %184, %186 : vector<2x128xf32>
    %188 = arith.subf %168, %116 : vector<2x128xf32>
    %189 = math.exp %188 : vector<2x128xf32>
    %190 = arith.addf %187, %189 : vector<2x128xf32>
    %191 = vector.broadcast %cst_72 : f32 to vector<2x128xf32>
    %192 = arith.mulf %191, %190 : vector<2x128xf32>
    %193 = vector.broadcast %cst_73 : f32 to vector<2x128xf32>
    %194 = arith.cmpf olt, %192, %193 : vector<2x128xf32>
    %c0_i32_84 = arith.constant 0 : i32
    %195 = arith.sitofp %c0_i32_84 : i32 to f32
    %196 = vector.broadcast %195 : f32 to vector<2x128xf32>
    %197 = arith.select %194, %77, %196 : vector<2x128xi1>, vector<2x128xf32>
    %198 = arith.addf %43, %197 : vector<2x128xf32>
    %c0_i32_85 = arith.constant 0 : i32
    %199 = arith.sitofp %c0_i32_85 : i32 to f32
    %200 = vector.broadcast %199 : f32 to vector<2x128xf32>
    %201 = arith.select %194, %90, %200 : vector<2x128xi1>, vector<2x128xf32>
    %202 = arith.addf %44, %201 : vector<2x128xf32>
    %c0_i32_86 = arith.constant 0 : i32
    %203 = arith.sitofp %c0_i32_86 : i32 to f32
    %204 = vector.broadcast %203 : f32 to vector<2x128xf32>
    %205 = arith.select %194, %103, %204 : vector<2x128xi1>, vector<2x128xf32>
    %206 = arith.addf %45, %205 : vector<2x128xf32>
    %c0_i32_87 = arith.constant 0 : i32
    %207 = arith.sitofp %c0_i32_87 : i32 to f32
    %208 = vector.broadcast %207 : f32 to vector<2x128xf32>
    %209 = arith.select %194, %116, %208 : vector<2x128xi1>, vector<2x128xf32>
    %210 = arith.addf %46, %209 : vector<2x128xf32>
    %c0_i32_88 = arith.constant 0 : i32
    %211 = arith.sitofp %c0_i32_88 : i32 to f32
    %212 = vector.broadcast %211 : f32 to vector<2x128xf32>
    %213 = arith.select %194, %129, %212 : vector<2x128xi1>, vector<2x128xf32>
    %214 = arith.addf %47, %213 : vector<2x128xf32>
    %c0_i32_89 = arith.constant 0 : i32
    %215 = arith.sitofp %c0_i32_89 : i32 to f32
    %216 = vector.broadcast %215 : f32 to vector<2x128xf32>
    %217 = arith.select %194, %142, %216 : vector<2x128xi1>, vector<2x128xf32>
    %218 = arith.addf %48, %217 : vector<2x128xf32>
    %c0_i32_90 = arith.constant 0 : i32
    %219 = arith.sitofp %c0_i32_90 : i32 to f32
    %220 = vector.broadcast %219 : f32 to vector<2x128xf32>
    %221 = arith.select %194, %155, %220 : vector<2x128xi1>, vector<2x128xf32>
    %222 = arith.addf %49, %221 : vector<2x128xf32>
    %c0_i32_91 = arith.constant 0 : i32
    %223 = arith.sitofp %c0_i32_91 : i32 to f32
    %224 = vector.broadcast %223 : f32 to vector<2x128xf32>
    %225 = arith.select %194, %168, %224 : vector<2x128xi1>, vector<2x128xf32>
    %226 = arith.addf %50, %225 : vector<2x128xf32>
    %c1_i32 = arith.constant 1 : i32
    %c128_i32_92 = arith.constant 128 : i32
    %227 = arith.muli %c1_i32, %c128_i32_92 : i32
    %228 = tpu.assume_multiple %227, 128 : i32
    %c0_93 = arith.constant 0 : index
    %c0_94 = arith.constant 0 : index
    %229 = arith.index_cast %228 : i32 to index
    %230 = vector.load %arg3[%c0_93, %c0_94, %229] : memref<4x2x256xf32, #tpu.memory_space<vmem>>, vector<1x2x128xf32>
    %231 = vector.shape_cast %230 : vector<1x2x128xf32> to vector<2x128xf32>
    %c1_95 = arith.constant 1 : index
    %c0_96 = arith.constant 0 : index
    %232 = arith.index_cast %228 : i32 to index
    %233 = vector.load %arg3[%c1_95, %c0_96, %232] : memref<4x2x256xf32, #tpu.memory_space<vmem>>, vector<1x2x128xf32>
    %234 = vector.shape_cast %233 : vector<1x2x128xf32> to vector<2x128xf32>
    %c2_97 = arith.constant 2 : index
    %c0_98 = arith.constant 0 : index
    %235 = arith.index_cast %228 : i32 to index
    %236 = vector.load %arg3[%c2_97, %c0_98, %235] : memref<4x2x256xf32, #tpu.memory_space<vmem>>, vector<1x2x128xf32>
    %237 = vector.shape_cast %236 : vector<1x2x128xf32> to vector<2x128xf32>
    %c3_99 = arith.constant 3 : index
    %c0_100 = arith.constant 0 : index
    %238 = arith.index_cast %228 : i32 to index
    %239 = vector.load %arg3[%c3_99, %c0_100, %238] : memref<4x2x256xf32, #tpu.memory_space<vmem>>, vector<1x2x128xf32>
    %240 = vector.shape_cast %239 : vector<1x2x128xf32> to vector<2x128xf32>
    %241 = vector.broadcast %3 : f32 to vector<2x128xf32>
    %242 = arith.mulf %231, %241 : vector<2x128xf32>
    %243 = vector.broadcast %4 : f32 to vector<2x128xf32>
    %244 = arith.mulf %234, %243 : vector<2x128xf32>
    %245 = arith.addf %242, %244 : vector<2x128xf32>
    %246 = vector.broadcast %5 : f32 to vector<2x128xf32>
    %247 = arith.mulf %237, %246 : vector<2x128xf32>
    %248 = arith.addf %245, %247 : vector<2x128xf32>
    %249 = vector.broadcast %6 : f32 to vector<2x128xf32>
    %250 = arith.mulf %240, %249 : vector<2x128xf32>
    %251 = arith.addf %248, %250 : vector<2x128xf32>
    %252 = vector.broadcast %35 : f32 to vector<2x128xf32>
    %253 = arith.addf %251, %252 : vector<2x128xf32>
    %254 = vector.broadcast %7 : f32 to vector<2x128xf32>
    %255 = arith.mulf %231, %254 : vector<2x128xf32>
    %256 = vector.broadcast %8 : f32 to vector<2x128xf32>
    %257 = arith.mulf %234, %256 : vector<2x128xf32>
    %258 = arith.addf %255, %257 : vector<2x128xf32>
    %259 = vector.broadcast %9 : f32 to vector<2x128xf32>
    %260 = arith.mulf %237, %259 : vector<2x128xf32>
    %261 = arith.addf %258, %260 : vector<2x128xf32>
    %262 = vector.broadcast %10 : f32 to vector<2x128xf32>
    %263 = arith.mulf %240, %262 : vector<2x128xf32>
    %264 = arith.addf %261, %263 : vector<2x128xf32>
    %265 = vector.broadcast %36 : f32 to vector<2x128xf32>
    %266 = arith.addf %264, %265 : vector<2x128xf32>
    %267 = vector.broadcast %11 : f32 to vector<2x128xf32>
    %268 = arith.mulf %231, %267 : vector<2x128xf32>
    %269 = vector.broadcast %12 : f32 to vector<2x128xf32>
    %270 = arith.mulf %234, %269 : vector<2x128xf32>
    %271 = arith.addf %268, %270 : vector<2x128xf32>
    %272 = vector.broadcast %13 : f32 to vector<2x128xf32>
    %273 = arith.mulf %237, %272 : vector<2x128xf32>
    %274 = arith.addf %271, %273 : vector<2x128xf32>
    %275 = vector.broadcast %14 : f32 to vector<2x128xf32>
    %276 = arith.mulf %240, %275 : vector<2x128xf32>
    %277 = arith.addf %274, %276 : vector<2x128xf32>
    %278 = vector.broadcast %37 : f32 to vector<2x128xf32>
    %279 = arith.addf %277, %278 : vector<2x128xf32>
    %280 = vector.broadcast %15 : f32 to vector<2x128xf32>
    %281 = arith.mulf %231, %280 : vector<2x128xf32>
    %282 = vector.broadcast %16 : f32 to vector<2x128xf32>
    %283 = arith.mulf %234, %282 : vector<2x128xf32>
    %284 = arith.addf %281, %283 : vector<2x128xf32>
    %285 = vector.broadcast %17 : f32 to vector<2x128xf32>
    %286 = arith.mulf %237, %285 : vector<2x128xf32>
    %287 = arith.addf %284, %286 : vector<2x128xf32>
    %288 = vector.broadcast %18 : f32 to vector<2x128xf32>
    %289 = arith.mulf %240, %288 : vector<2x128xf32>
    %290 = arith.addf %287, %289 : vector<2x128xf32>
    %291 = vector.broadcast %38 : f32 to vector<2x128xf32>
    %292 = arith.addf %290, %291 : vector<2x128xf32>
    %293 = vector.broadcast %19 : f32 to vector<2x128xf32>
    %294 = arith.mulf %231, %293 : vector<2x128xf32>
    %295 = vector.broadcast %20 : f32 to vector<2x128xf32>
    %296 = arith.mulf %234, %295 : vector<2x128xf32>
    %297 = arith.addf %294, %296 : vector<2x128xf32>
    %298 = vector.broadcast %21 : f32 to vector<2x128xf32>
    %299 = arith.mulf %237, %298 : vector<2x128xf32>
    %300 = arith.addf %297, %299 : vector<2x128xf32>
    %301 = vector.broadcast %22 : f32 to vector<2x128xf32>
    %302 = arith.mulf %240, %301 : vector<2x128xf32>
    %303 = arith.addf %300, %302 : vector<2x128xf32>
    %304 = vector.broadcast %39 : f32 to vector<2x128xf32>
    %305 = arith.addf %303, %304 : vector<2x128xf32>
    %306 = vector.broadcast %23 : f32 to vector<2x128xf32>
    %307 = arith.mulf %231, %306 : vector<2x128xf32>
    %308 = vector.broadcast %24 : f32 to vector<2x128xf32>
    %309 = arith.mulf %234, %308 : vector<2x128xf32>
    %310 = arith.addf %307, %309 : vector<2x128xf32>
    %311 = vector.broadcast %25 : f32 to vector<2x128xf32>
    %312 = arith.mulf %237, %311 : vector<2x128xf32>
    %313 = arith.addf %310, %312 : vector<2x128xf32>
    %314 = vector.broadcast %26 : f32 to vector<2x128xf32>
    %315 = arith.mulf %240, %314 : vector<2x128xf32>
    %316 = arith.addf %313, %315 : vector<2x128xf32>
    %317 = vector.broadcast %40 : f32 to vector<2x128xf32>
    %318 = arith.addf %316, %317 : vector<2x128xf32>
    %319 = vector.broadcast %27 : f32 to vector<2x128xf32>
    %320 = arith.mulf %231, %319 : vector<2x128xf32>
    %321 = vector.broadcast %28 : f32 to vector<2x128xf32>
    %322 = arith.mulf %234, %321 : vector<2x128xf32>
    %323 = arith.addf %320, %322 : vector<2x128xf32>
    %324 = vector.broadcast %29 : f32 to vector<2x128xf32>
    %325 = arith.mulf %237, %324 : vector<2x128xf32>
    %326 = arith.addf %323, %325 : vector<2x128xf32>
    %327 = vector.broadcast %30 : f32 to vector<2x128xf32>
    %328 = arith.mulf %240, %327 : vector<2x128xf32>
    %329 = arith.addf %326, %328 : vector<2x128xf32>
    %330 = vector.broadcast %41 : f32 to vector<2x128xf32>
    %331 = arith.addf %329, %330 : vector<2x128xf32>
    %332 = vector.broadcast %31 : f32 to vector<2x128xf32>
    %333 = arith.mulf %231, %332 : vector<2x128xf32>
    %334 = vector.broadcast %32 : f32 to vector<2x128xf32>
    %335 = arith.mulf %234, %334 : vector<2x128xf32>
    %336 = arith.addf %333, %335 : vector<2x128xf32>
    %337 = vector.broadcast %33 : f32 to vector<2x128xf32>
    %338 = arith.mulf %237, %337 : vector<2x128xf32>
    %339 = arith.addf %336, %338 : vector<2x128xf32>
    %340 = vector.broadcast %34 : f32 to vector<2x128xf32>
    %341 = arith.mulf %240, %340 : vector<2x128xf32>
    %342 = arith.addf %339, %341 : vector<2x128xf32>
    %343 = vector.broadcast %42 : f32 to vector<2x128xf32>
    %344 = arith.addf %342, %343 : vector<2x128xf32>
    %cst_101 = arith.constant 1.000000e+00 : f32
    %345 = vector.broadcast %cst_101 : f32 to vector<2x128xf32>
    %346 = arith.subf %253, %292 : vector<2x128xf32>
    %347 = math.exp %346 : vector<2x128xf32>
    %348 = arith.addf %345, %347 : vector<2x128xf32>
    %349 = arith.subf %266, %292 : vector<2x128xf32>
    %350 = math.exp %349 : vector<2x128xf32>
    %351 = arith.addf %348, %350 : vector<2x128xf32>
    %352 = arith.subf %279, %292 : vector<2x128xf32>
    %353 = math.exp %352 : vector<2x128xf32>
    %354 = arith.addf %351, %353 : vector<2x128xf32>
    %355 = arith.subf %305, %292 : vector<2x128xf32>
    %356 = math.exp %355 : vector<2x128xf32>
    %357 = arith.addf %354, %356 : vector<2x128xf32>
    %358 = arith.subf %318, %292 : vector<2x128xf32>
    %359 = math.exp %358 : vector<2x128xf32>
    %360 = arith.addf %357, %359 : vector<2x128xf32>
    %361 = arith.subf %331, %292 : vector<2x128xf32>
    %362 = math.exp %361 : vector<2x128xf32>
    %363 = arith.addf %360, %362 : vector<2x128xf32>
    %364 = arith.subf %344, %292 : vector<2x128xf32>
    %365 = math.exp %364 : vector<2x128xf32>
    %366 = arith.addf %363, %365 : vector<2x128xf32>
    %367 = vector.broadcast %cst_72 : f32 to vector<2x128xf32>
    %368 = arith.mulf %367, %366 : vector<2x128xf32>
    %369 = vector.broadcast %cst_73 : f32 to vector<2x128xf32>
    %370 = arith.cmpf olt, %368, %369 : vector<2x128xf32>
    %c0_i32_102 = arith.constant 0 : i32
    %371 = arith.sitofp %c0_i32_102 : i32 to f32
    %372 = vector.broadcast %371 : f32 to vector<2x128xf32>
    %373 = arith.select %370, %253, %372 : vector<2x128xi1>, vector<2x128xf32>
    %374 = arith.addf %198, %373 : vector<2x128xf32>
    %c0_i32_103 = arith.constant 0 : i32
    %375 = arith.sitofp %c0_i32_103 : i32 to f32
    %376 = vector.broadcast %375 : f32 to vector<2x128xf32>
    %377 = arith.select %370, %266, %376 : vector<2x128xi1>, vector<2x128xf32>
    %378 = arith.addf %202, %377 : vector<2x128xf32>
    %c0_i32_104 = arith.constant 0 : i32
    %379 = arith.sitofp %c0_i32_104 : i32 to f32
    %380 = vector.broadcast %379 : f32 to vector<2x128xf32>
    %381 = arith.select %370, %279, %380 : vector<2x128xi1>, vector<2x128xf32>
    %382 = arith.addf %206, %381 : vector<2x128xf32>
    %c0_i32_105 = arith.constant 0 : i32
    %383 = arith.sitofp %c0_i32_105 : i32 to f32
    %384 = vector.broadcast %383 : f32 to vector<2x128xf32>
    %385 = arith.select %370, %292, %384 : vector<2x128xi1>, vector<2x128xf32>
    %386 = arith.addf %210, %385 : vector<2x128xf32>
    %c0_i32_106 = arith.constant 0 : i32
    %387 = arith.sitofp %c0_i32_106 : i32 to f32
    %388 = vector.broadcast %387 : f32 to vector<2x128xf32>
    %389 = arith.select %370, %305, %388 : vector<2x128xi1>, vector<2x128xf32>
    %390 = arith.addf %214, %389 : vector<2x128xf32>
    %c0_i32_107 = arith.constant 0 : i32
    %391 = arith.sitofp %c0_i32_107 : i32 to f32
    %392 = vector.broadcast %391 : f32 to vector<2x128xf32>
    %393 = arith.select %370, %318, %392 : vector<2x128xi1>, vector<2x128xf32>
    %394 = arith.addf %218, %393 : vector<2x128xf32>
    %c0_i32_108 = arith.constant 0 : i32
    %395 = arith.sitofp %c0_i32_108 : i32 to f32
    %396 = vector.broadcast %395 : f32 to vector<2x128xf32>
    %397 = arith.select %370, %331, %396 : vector<2x128xi1>, vector<2x128xf32>
    %398 = arith.addf %222, %397 : vector<2x128xf32>
    %c0_i32_109 = arith.constant 0 : i32
    %399 = arith.sitofp %c0_i32_109 : i32 to f32
    %400 = vector.broadcast %399 : f32 to vector<2x128xf32>
    %401 = arith.select %370, %344, %400 : vector<2x128xi1>, vector<2x128xf32>
    %402 = arith.addf %226, %401 : vector<2x128xf32>
    %c2_i32 = arith.constant 2 : i32
    %c0_110 = arith.constant 0 : index
    %c0_111 = arith.constant 0 : index
    %c0_112 = arith.constant 0 : index
    %403 = vector.load %arg7[%c0_110, %c0_111, %c0_112] : memref<8x2x128xf32, #tpu.memory_space<vmem>>, vector<1x2x128xf32>
    %404 = vector.shape_cast %403 : vector<1x2x128xf32> to vector<2x128xf32>
    %405 = arith.addf %404, %374 : vector<2x128xf32>
    %c0_113 = arith.constant 0 : index
    %c0_114 = arith.constant 0 : index
    %c0_115 = arith.constant 0 : index
    %406 = vector.load %arg7[%c0_113, %c0_114, %c0_115] : memref<8x2x128xf32, #tpu.memory_space<vmem>>, vector<1x2x128xf32>
    %407 = vector.shape_cast %406 : vector<1x2x128xf32> to vector<2x128xf32>
    %408 = vector.shape_cast %405 : vector<2x128xf32> to vector<1x2x128xf32>
    tpu.vector_store %arg7[%c0_113, %c0_114, %c0_115], %408 {strides = array<i32>} : memref<8x2x128xf32, #tpu.memory_space<vmem>>, vector<1x2x128xf32>,
    %c1_116 = arith.constant 1 : index
    %c0_117 = arith.constant 0 : index
    %c0_118 = arith.constant 0 : index
    %409 = vector.load %arg7[%c1_116, %c0_117, %c0_118] : memref<8x2x128xf32, #tpu.memory_space<vmem>>, vector<1x2x128xf32>
    %410 = vector.shape_cast %409 : vector<1x2x128xf32> to vector<2x128xf32>
    %411 = arith.addf %410, %378 : vector<2x128xf32>
    %c1_119 = arith.constant 1 : index
    %c0_120 = arith.constant 0 : index
    %c0_121 = arith.constant 0 : index
    %412 = vector.load %arg7[%c1_119, %c0_120, %c0_121] : memref<8x2x128xf32, #tpu.memory_space<vmem>>, vector<1x2x128xf32>
    %413 = vector.shape_cast %412 : vector<1x2x128xf32> to vector<2x128xf32>
    %414 = vector.shape_cast %411 : vector<2x128xf32> to vector<1x2x128xf32>
    tpu.vector_store %arg7[%c1_119, %c0_120, %c0_121], %414 {strides = array<i32>} : memref<8x2x128xf32, #tpu.memory_space<vmem>>, vector<1x2x128xf32>,
    %c2_122 = arith.constant 2 : index
    %c0_123 = arith.constant 0 : index
    %c0_124 = arith.constant 0 : index
    %415 = vector.load %arg7[%c2_122, %c0_123, %c0_124] : memref<8x2x128xf32, #tpu.memory_space<vmem>>, vector<1x2x128xf32>
    %416 = vector.shape_cast %415 : vector<1x2x128xf32> to vector<2x128xf32>
    %417 = arith.addf %416, %382 : vector<2x128xf32>
    %c2_125 = arith.constant 2 : index
    %c0_126 = arith.constant 0 : index
    %c0_127 = arith.constant 0 : index
    %418 = vector.load %arg7[%c2_125, %c0_126, %c0_127] : memref<8x2x128xf32, #tpu.memory_space<vmem>>, vector<1x2x128xf32>
    %419 = vector.shape_cast %418 : vector<1x2x128xf32> to vector<2x128xf32>
    %420 = vector.shape_cast %417 : vector<2x128xf32> to vector<1x2x128xf32>
    tpu.vector_store %arg7[%c2_125, %c0_126, %c0_127], %420 {strides = array<i32>} : memref<8x2x128xf32, #tpu.memory_space<vmem>>, vector<1x2x128xf32>,
    %c3_128 = arith.constant 3 : index
    %c0_129 = arith.constant 0 : index
    %c0_130 = arith.constant 0 : index
    %421 = vector.load %arg7[%c3_128, %c0_129, %c0_130] : memref<8x2x128xf32, #tpu.memory_space<vmem>>, vector<1x2x128xf32>
    %422 = vector.shape_cast %421 : vector<1x2x128xf32> to vector<2x128xf32>
    %423 = arith.addf %422, %386 : vector<2x128xf32>
    %c3_131 = arith.constant 3 : index
    %c0_132 = arith.constant 0 : index
    %c0_133 = arith.constant 0 : index
    %424 = vector.load %arg7[%c3_131, %c0_132, %c0_133] : memref<8x2x128xf32, #tpu.memory_space<vmem>>, vector<1x2x128xf32>
    %425 = vector.shape_cast %424 : vector<1x2x128xf32> to vector<2x128xf32>
    %426 = vector.shape_cast %423 : vector<2x128xf32> to vector<1x2x128xf32>
    tpu.vector_store %arg7[%c3_131, %c0_132, %c0_133], %426 {strides = array<i32>} : memref<8x2x128xf32, #tpu.memory_space<vmem>>, vector<1x2x128xf32>,
    %c4_134 = arith.constant 4 : index
    %c0_135 = arith.constant 0 : index
    %c0_136 = arith.constant 0 : index
    %427 = vector.load %arg7[%c4_134, %c0_135, %c0_136] : memref<8x2x128xf32, #tpu.memory_space<vmem>>, vector<1x2x128xf32>
    %428 = vector.shape_cast %427 : vector<1x2x128xf32> to vector<2x128xf32>
    %429 = arith.addf %428, %390 : vector<2x128xf32>
    %c4_137 = arith.constant 4 : index
    %c0_138 = arith.constant 0 : index
    %c0_139 = arith.constant 0 : index
    %430 = vector.load %arg7[%c4_137, %c0_138, %c0_139] : memref<8x2x128xf32, #tpu.memory_space<vmem>>, vector<1x2x128xf32>
    %431 = vector.shape_cast %430 : vector<1x2x128xf32> to vector<2x128xf32>
    %432 = vector.shape_cast %429 : vector<2x128xf32> to vector<1x2x128xf32>
    tpu.vector_store %arg7[%c4_137, %c0_138, %c0_139], %432 {strides = array<i32>} : memref<8x2x128xf32, #tpu.memory_space<vmem>>, vector<1x2x128xf32>,
    %c5_140 = arith.constant 5 : index
    %c0_141 = arith.constant 0 : index
    %c0_142 = arith.constant 0 : index
    %433 = vector.load %arg7[%c5_140, %c0_141, %c0_142] : memref<8x2x128xf32, #tpu.memory_space<vmem>>, vector<1x2x128xf32>
    %434 = vector.shape_cast %433 : vector<1x2x128xf32> to vector<2x128xf32>
    %435 = arith.addf %434, %394 : vector<2x128xf32>
    %c5_143 = arith.constant 5 : index
    %c0_144 = arith.constant 0 : index
    %c0_145 = arith.constant 0 : index
    %436 = vector.load %arg7[%c5_143, %c0_144, %c0_145] : memref<8x2x128xf32, #tpu.memory_space<vmem>>, vector<1x2x128xf32>
    %437 = vector.shape_cast %436 : vector<1x2x128xf32> to vector<2x128xf32>
    %438 = vector.shape_cast %435 : vector<2x128xf32> to vector<1x2x128xf32>
    tpu.vector_store %arg7[%c5_143, %c0_144, %c0_145], %438 {strides = array<i32>} : memref<8x2x128xf32, #tpu.memory_space<vmem>>, vector<1x2x128xf32>,
    %c6_146 = arith.constant 6 : index
    %c0_147 = arith.constant 0 : index
    %c0_148 = arith.constant 0 : index
    %439 = vector.load %arg7[%c6_146, %c0_147, %c0_148] : memref<8x2x128xf32, #tpu.memory_space<vmem>>, vector<1x2x128xf32>
    %440 = vector.shape_cast %439 : vector<1x2x128xf32> to vector<2x128xf32>
    %441 = arith.addf %440, %398 : vector<2x128xf32>
    %c6_149 = arith.constant 6 : index
    %c0_150 = arith.constant 0 : index
    %c0_151 = arith.constant 0 : index
    %442 = vector.load %arg7[%c6_149, %c0_150, %c0_151] : memref<8x2x128xf32, #tpu.memory_space<vmem>>, vector<1x2x128xf32>
    %443 = vector.shape_cast %442 : vector<1x2x128xf32> to vector<2x128xf32>
    %444 = vector.shape_cast %441 : vector<2x128xf32> to vector<1x2x128xf32>
    tpu.vector_store %arg7[%c6_149, %c0_150, %c0_151], %444 {strides = array<i32>} : memref<8x2x128xf32, #tpu.memory_space<vmem>>, vector<1x2x128xf32>,
    %c7_152 = arith.constant 7 : index
    %c0_153 = arith.constant 0 : index
    %c0_154 = arith.constant 0 : index
    %445 = vector.load %arg7[%c7_152, %c0_153, %c0_154] : memref<8x2x128xf32, #tpu.memory_space<vmem>>, vector<1x2x128xf32>
    %446 = vector.shape_cast %445 : vector<1x2x128xf32> to vector<2x128xf32>
    %447 = arith.addf %446, %402 : vector<2x128xf32>
    %c7_155 = arith.constant 7 : index
    %c0_156 = arith.constant 0 : index
    %c0_157 = arith.constant 0 : index
    %448 = vector.load %arg7[%c7_155, %c0_156, %c0_157] : memref<8x2x128xf32, #tpu.memory_space<vmem>>, vector<1x2x128xf32>
    %449 = vector.shape_cast %448 : vector<1x2x128xf32> to vector<2x128xf32>
    %450 = vector.shape_cast %447 : vector<2x128xf32> to vector<1x2x128xf32>
    tpu.vector_store %arg7[%c7_155, %c0_156, %c0_157], %450 {strides = array<i32>} : memref<8x2x128xf32, #tpu.memory_space<vmem>>, vector<1x2x128xf32>,
    %c0_i32_158 = arith.constant 0 : i32
    %451 = arith.cmpi eq, %arg2, %c0_i32_158 : i32
    %452 = arith.extui %451 : i1 to i32
    %c0_i32_159 = arith.constant 0 : i32
    %453 = arith.cmpi ne, %452, %c0_i32_159 : i32
    scf.if %453 {
      %c0_160 = arith.constant 0 : index
      %c0_161 = arith.constant 0 : index
      %c0_162 = arith.constant 0 : index
      %454 = vector.load %arg7[%c0_160, %c0_161, %c0_162] : memref<8x2x128xf32, #tpu.memory_space<vmem>>, vector<1x2x128xf32>
      %455 = vector.shape_cast %454 : vector<1x2x128xf32> to vector<2x128xf32>
      %cst_163 = arith.constant dense<0.000000e+00> : vector<2xf32>
      %456 = vector.multi_reduction <add>, %455, %cst_163 [1] : vector<2x128xf32> to vector<2xf32>
      %457 = vector.shape_cast %456 : vector<2xf32> to vector<2x1xf32>
      %cst_164 = arith.constant 3.906250e-03 : f32
      %458 = vector.broadcast %cst_164 : f32 to vector<2x1xf32>
      %459 = arith.mulf %457, %458 : vector<2x1xf32>
      %c0_165 = arith.constant 0 : index
      %c0_166 = arith.constant 0 : index
      %c0_167 = arith.constant 0 : index
      %460 = vector.load %arg6[%c0_165, %c0_166, %c0_167] : memref<1x2x8xf32, #tpu.memory_space<vmem>>, vector<1x2x1xf32>
      %461 = vector.shape_cast %460 : vector<1x2x1xf32> to vector<2x1xf32>
      %462 = vector.shape_cast %459 : vector<2x1xf32> to vector<1x2x1xf32>
      tpu.vector_store %arg6[%c0_165, %c0_166, %c0_167], %462 {strides = array<i32>} : memref<1x2x8xf32, #tpu.memory_space<vmem>>, vector<1x2x1xf32>,
      %c1_168 = arith.constant 1 : index
      %c0_169 = arith.constant 0 : index
      %c0_170 = arith.constant 0 : index
      %463 = vector.load %arg7[%c1_168, %c0_169, %c0_170] : memref<8x2x128xf32, #tpu.memory_space<vmem>>, vector<1x2x128xf32>
      %464 = vector.shape_cast %463 : vector<1x2x128xf32> to vector<2x128xf32>
      %cst_171 = arith.constant dense<0.000000e+00> : vector<2xf32>
      %465 = vector.multi_reduction <add>, %464, %cst_171 [1] : vector<2x128xf32> to vector<2xf32>
      %466 = vector.shape_cast %465 : vector<2xf32> to vector<2x1xf32>
      %cst_172 = arith.constant 3.906250e-03 : f32
      %467 = vector.broadcast %cst_172 : f32 to vector<2x1xf32>
      %468 = arith.mulf %466, %467 : vector<2x1xf32>
      %c0_173 = arith.constant 0 : index
      %c0_174 = arith.constant 0 : index
      %c1_175 = arith.constant 1 : index
      %469 = vector.load %arg6[%c0_173, %c0_174, %c1_175] : memref<1x2x8xf32, #tpu.memory_space<vmem>>, vector<1x2x1xf32>
      %470 = vector.shape_cast %469 : vector<1x2x1xf32> to vector<2x1xf32>
      %471 = vector.shape_cast %468 : vector<2x1xf32> to vector<1x2x1xf32>
      tpu.vector_store %arg6[%c0_173, %c0_174, %c1_175], %471 {strides = array<i32>} : memref<1x2x8xf32, #tpu.memory_space<vmem>>, vector<1x2x1xf32>,
      %c2_176 = arith.constant 2 : index
      %c0_177 = arith.constant 0 : index
      %c0_178 = arith.constant 0 : index
      %472 = vector.load %arg7[%c2_176, %c0_177, %c0_178] : memref<8x2x128xf32, #tpu.memory_space<vmem>>, vector<1x2x128xf32>
      %473 = vector.shape_cast %472 : vector<1x2x128xf32> to vector<2x128xf32>
      %cst_179 = arith.constant dense<0.000000e+00> : vector<2xf32>
      %474 = vector.multi_reduction <add>, %473, %cst_179 [1] : vector<2x128xf32> to vector<2xf32>
      %475 = vector.shape_cast %474 : vector<2xf32> to vector<2x1xf32>
      %cst_180 = arith.constant 3.906250e-03 : f32
      %476 = vector.broadcast %cst_180 : f32 to vector<2x1xf32>
      %477 = arith.mulf %475, %476 : vector<2x1xf32>
      %c0_181 = arith.constant 0 : index
      %c0_182 = arith.constant 0 : index
      %c2_183 = arith.constant 2 : index
      %478 = vector.load %arg6[%c0_181, %c0_182, %c2_183] : memref<1x2x8xf32, #tpu.memory_space<vmem>>, vector<1x2x1xf32>
      %479 = vector.shape_cast %478 : vector<1x2x1xf32> to vector<2x1xf32>
      %480 = vector.shape_cast %477 : vector<2x1xf32> to vector<1x2x1xf32>
      tpu.vector_store %arg6[%c0_181, %c0_182, %c2_183], %480 {strides = array<i32>} : memref<1x2x8xf32, #tpu.memory_space<vmem>>, vector<1x2x1xf32>,
      %c3_184 = arith.constant 3 : index
      %c0_185 = arith.constant 0 : index
      %c0_186 = arith.constant 0 : index
      %481 = vector.load %arg7[%c3_184, %c0_185, %c0_186] : memref<8x2x128xf32, #tpu.memory_space<vmem>>, vector<1x2x128xf32>
      %482 = vector.shape_cast %481 : vector<1x2x128xf32> to vector<2x128xf32>
      %cst_187 = arith.constant dense<0.000000e+00> : vector<2xf32>
      %483 = vector.multi_reduction <add>, %482, %cst_187 [1] : vector<2x128xf32> to vector<2xf32>
      %484 = vector.shape_cast %483 : vector<2xf32> to vector<2x1xf32>
      %cst_188 = arith.constant 3.906250e-03 : f32
      %485 = vector.broadcast %cst_188 : f32 to vector<2x1xf32>
      %486 = arith.mulf %484, %485 : vector<2x1xf32>
      %c0_189 = arith.constant 0 : index
      %c0_190 = arith.constant 0 : index
      %c3_191 = arith.constant 3 : index
      %487 = vector.load %arg6[%c0_189, %c0_190, %c3_191] : memref<1x2x8xf32, #tpu.memory_space<vmem>>, vector<1x2x1xf32>
      %488 = vector.shape_cast %487 : vector<1x2x1xf32> to vector<2x1xf32>
      %489 = vector.shape_cast %486 : vector<2x1xf32> to vector<1x2x1xf32>
      tpu.vector_store %arg6[%c0_189, %c0_190, %c3_191], %489 {strides = array<i32>} : memref<1x2x8xf32, #tpu.memory_space<vmem>>, vector<1x2x1xf32>,
      %c4_192 = arith.constant 4 : index
      %c0_193 = arith.constant 0 : index
      %c0_194 = arith.constant 0 : index
      %490 = vector.load %arg7[%c4_192, %c0_193, %c0_194] : memref<8x2x128xf32, #tpu.memory_space<vmem>>, vector<1x2x128xf32>
      %491 = vector.shape_cast %490 : vector<1x2x128xf32> to vector<2x128xf32>
      %cst_195 = arith.constant dense<0.000000e+00> : vector<2xf32>
      %492 = vector.multi_reduction <add>, %491, %cst_195 [1] : vector<2x128xf32> to vector<2xf32>
      %493 = vector.shape_cast %492 : vector<2xf32> to vector<2x1xf32>
      %cst_196 = arith.constant 3.906250e-03 : f32
      %494 = vector.broadcast %cst_196 : f32 to vector<2x1xf32>
      %495 = arith.mulf %493, %494 : vector<2x1xf32>
      %c0_197 = arith.constant 0 : index
      %c0_198 = arith.constant 0 : index
      %c4_199 = arith.constant 4 : index
      %496 = vector.load %arg6[%c0_197, %c0_198, %c4_199] : memref<1x2x8xf32, #tpu.memory_space<vmem>>, vector<1x2x1xf32>
      %497 = vector.shape_cast %496 : vector<1x2x1xf32> to vector<2x1xf32>
      %498 = vector.shape_cast %495 : vector<2x1xf32> to vector<1x2x1xf32>
      tpu.vector_store %arg6[%c0_197, %c0_198, %c4_199], %498 {strides = array<i32>} : memref<1x2x8xf32, #tpu.memory_space<vmem>>, vector<1x2x1xf32>,
      %c5_200 = arith.constant 5 : index
      %c0_201 = arith.constant 0 : index
      %c0_202 = arith.constant 0 : index
      %499 = vector.load %arg7[%c5_200, %c0_201, %c0_202] : memref<8x2x128xf32, #tpu.memory_space<vmem>>, vector<1x2x128xf32>
      %500 = vector.shape_cast %499 : vector<1x2x128xf32> to vector<2x128xf32>
      %cst_203 = arith.constant dense<0.000000e+00> : vector<2xf32>
      %501 = vector.multi_reduction <add>, %500, %cst_203 [1] : vector<2x128xf32> to vector<2xf32>
      %502 = vector.shape_cast %501 : vector<2xf32> to vector<2x1xf32>
      %cst_204 = arith.constant 3.906250e-03 : f32
      %503 = vector.broadcast %cst_204 : f32 to vector<2x1xf32>
      %504 = arith.mulf %502, %503 : vector<2x1xf32>
      %c0_205 = arith.constant 0 : index
      %c0_206 = arith.constant 0 : index
      %c5_207 = arith.constant 5 : index
      %505 = vector.load %arg6[%c0_205, %c0_206, %c5_207] : memref<1x2x8xf32, #tpu.memory_space<vmem>>, vector<1x2x1xf32>
      %506 = vector.shape_cast %505 : vector<1x2x1xf32> to vector<2x1xf32>
      %507 = vector.shape_cast %504 : vector<2x1xf32> to vector<1x2x1xf32>
      tpu.vector_store %arg6[%c0_205, %c0_206, %c5_207], %507 {strides = array<i32>} : memref<1x2x8xf32, #tpu.memory_space<vmem>>, vector<1x2x1xf32>,
      %c6_208 = arith.constant 6 : index
      %c0_209 = arith.constant 0 : index
      %c0_210 = arith.constant 0 : index
      %508 = vector.load %arg7[%c6_208, %c0_209, %c0_210] : memref<8x2x128xf32, #tpu.memory_space<vmem>>, vector<1x2x128xf32>
      %509 = vector.shape_cast %508 : vector<1x2x128xf32> to vector<2x128xf32>
      %cst_211 = arith.constant dense<0.000000e+00> : vector<2xf32>
      %510 = vector.multi_reduction <add>, %509, %cst_211 [1] : vector<2x128xf32> to vector<2xf32>
      %511 = vector.shape_cast %510 : vector<2xf32> to vector<2x1xf32>
      %cst_212 = arith.constant 3.906250e-03 : f32
      %512 = vector.broadcast %cst_212 : f32 to vector<2x1xf32>
      %513 = arith.mulf %511, %512 : vector<2x1xf32>
      %c0_213 = arith.constant 0 : index
      %c0_214 = arith.constant 0 : index
      %c6_215 = arith.constant 6 : index
      %514 = vector.load %arg6[%c0_213, %c0_214, %c6_215] : memref<1x2x8xf32, #tpu.memory_space<vmem>>, vector<1x2x1xf32>
      %515 = vector.shape_cast %514 : vector<1x2x1xf32> to vector<2x1xf32>
      %516 = vector.shape_cast %513 : vector<2x1xf32> to vector<1x2x1xf32>
      tpu.vector_store %arg6[%c0_213, %c0_214, %c6_215], %516 {strides = array<i32>} : memref<1x2x8xf32, #tpu.memory_space<vmem>>, vector<1x2x1xf32>,
      %c7_216 = arith.constant 7 : index
      %c0_217 = arith.constant 0 : index
      %c0_218 = arith.constant 0 : index
      %517 = vector.load %arg7[%c7_216, %c0_217, %c0_218] : memref<8x2x128xf32, #tpu.memory_space<vmem>>, vector<1x2x128xf32>
      %518 = vector.shape_cast %517 : vector<1x2x128xf32> to vector<2x128xf32>
      %cst_219 = arith.constant dense<0.000000e+00> : vector<2xf32>
      %519 = vector.multi_reduction <add>, %518, %cst_219 [1] : vector<2x128xf32> to vector<2xf32>
      %520 = vector.shape_cast %519 : vector<2xf32> to vector<2x1xf32>
      %cst_220 = arith.constant 3.906250e-03 : f32
      %521 = vector.broadcast %cst_220 : f32 to vector<2x1xf32>
      %522 = arith.mulf %520, %521 : vector<2x1xf32>
      %c0_221 = arith.constant 0 : index
      %c0_222 = arith.constant 0 : index
      %c7_223 = arith.constant 7 : index
      %523 = vector.load %arg6[%c0_221, %c0_222, %c7_223] : memref<1x2x8xf32, #tpu.memory_space<vmem>>, vector<1x2x1xf32>
      %524 = vector.shape_cast %523 : vector<1x2x1xf32> to vector<2x1xf32>
      %525 = vector.shape_cast %522 : vector<2x1xf32> to vector<1x2x1xf32>
      tpu.vector_store %arg6[%c0_221, %c0_222, %c7_223], %525 {strides = array<i32>} : memref<1x2x8xf32, #tpu.memory_space<vmem>>, vector<1x2x1xf32>,
    } else {
    }
    return
  }
  func.func @transform_0(%arg0: i32, %arg1: i32, %arg2: i32) -> (i32, i32, i32) {
    %c1_i32 = arith.constant 1 : i32
    %0 = arith.muli %arg0, %c1_i32 : i32
    %1 = arith.addi %0, %arg2 : i32
    %c0_i32 = arith.constant 0 : i32
    %c0_i32_0 = arith.constant 0 : i32
    return %c0_i32, %arg1, %1 : i32, i32, i32
  }
  func.func @transform_1(%arg0: i32, %arg1: i32, %arg2: i32) -> (i32, i32) {
    %c0_i32 = arith.constant 0 : i32
    %c0_i32_0 = arith.constant 0 : i32
    %c0_i32_1 = arith.constant 0 : i32
    return %c0_i32, %c0_i32_0 : i32, i32
  }
  func.func @transform_2(%arg0: i32, %arg1: i32, %arg2: i32) -> i32 {
    %c0_i32 = arith.constant 0 : i32
    %c0_i32_0 = arith.constant 0 : i32
    return %c0_i32 : i32
  }
  func.func @transform_3(%arg0: i32, %arg1: i32, %arg2: i32) -> (i32, i32, i32) {
    %c0_i32 = arith.constant 0 : i32
    %c0_i32_0 = arith.constant 0 : i32
    return %arg0, %arg1, %c0_i32 : i32, i32, i32
  }
}

</mosaic_0001>

<llo_original>
// kernel: tpu_custom_call.1
$region0: #{tpu_custom_call.1}
  #allocation0 [shape = 'u32[]', space=smem, size = 0x4, offset = 0x4, fixed_abs, tag = 'smem constant byte address 0x4 - core index']
  #allocation1 [shape = 'u32[144,128]{1,0:T(1,128)}', space=vmem, size = 0x12000, scoped, tag = 'internal scratch']
  #allocation2 [shape = 'f32[8,2,128]{2,1,0:T(2,128)}', space=vmem, size = 0x2000, scoped, tag = 'scratch operand']
  %s0 = inlined_call_operand.hbm [shape: f32[4,2,256], index: 0, kind: input, shape index: {}]
  %s1 = inlined_call_operand.vmem [shape: f32[8,4], index: 1, kind: input, shape index: {}]
  %s2 = inlined_call_operand.vmem [shape: f32[8], index: 2, kind: input, shape index: {}]
  %s3 = inlined_call_operand.hbm [shape: f32[1,2,8], index: 3, kind: output, shape index: {}]
  %s4 = sld [smem:[#allocation0]]
  $region42: #{tpu_custom_call.1} parent=0
    _
  %s6 = ssub.s32 1, %s4
  %s7 = scalar_select 0, %s6, %s4
  $region1: #{tpu_custom_call.1} parent=0
    #allocation3 [shape = 'u8[8192]{0}', space=vmem, size = 0x2000, scoped, tag = 'input window, operand 0, single buffered']
    #allocation4 [shape = 's32[1]{0}', space=sflag, size = 0x4, scoped, tag = 'scoped memory for tpu_custom_call.1']
    #allocation5 [shape = 's32[1]{0}', space=sflag, size = 0x4, scoped, tag = 'scoped memory for tpu_custom_call.1']
    #allocation6 [shape = 's32[1]{0}', space=sflag, size = 0x4, scoped, tag = 'scoped memory for tpu_custom_call.1']
    #allocation7 [shape = 'u8[4096]{0}', space=smem, size = 0x1000, scoped, tag = 'input window, operand 1, single buffered']
    #allocation8 [shape = 'u8[512]{0}', space=smem, size = 0x200, scoped, tag = 'input window, operand 2, single buffered']
    #allocation9 [shape = 's32[1]{0}', space=sflag, size = 0x4, scoped, tag = 'scoped memory for tpu_custom_call.1']
    #allocation10 [shape = 'u8[1024]{0}', space=vmem, size = 0x400, scoped, tag = 'output window, operand 0, single buffered']
    %8 = vsyncpa [#allocation4], 0
    %9 = vsyncpa [#allocation6], 0
    %10 = vsyncpa [#allocation9], 0
    %11 = vsyncpa [#allocation5], 0
    // Predicated region
    $region2: #{tpu_custom_call.1} parent=1 // pred_check
      _
    $region3: #{tpu_custom_call.1} parent=1 // pred_check_branch
      %13 = sbr.rel (0) target = $region5
    $region4: #{tpu_custom_call.1} parent=1 // pred_region
      %s14 = sadd.s32 0, 0
      %s15 = smul.u32 2, %s14
      %s17 = ssub.s32 256, 256
      %18 = vsyncadd [#allocation4], %s17
      %s19 = smul.addr %s15, 32
      %s20 = scalar_lea.hbm %s0, %s19
      %s21 = sshll.u32 [#allocation3], 4
      %s22 = int_to_ptr.vmem [resolvable:$true] %s21
      %27 = dma.hbm_to_vmem [thread:$0]  %s20, 256, %s22, [#allocation4], 64, 64, 4
    $region5: #{tpu_custom_call.1} parent=1 // pred_fallthru
      _
    // Predicated region
    $region6: #{tpu_custom_call.1} parent=1 // pred_check
      _
    $region7: #{tpu_custom_call.1} parent=1 // pred_check_branch
      %29 = sbr.rel (0) target = $region9
    $region8: #{tpu_custom_call.1} parent=1 // pred_region
      %s31 = ssub.s32 128, 128
      %32 = vsyncadd [#allocation6], %s31
      %s34 = sshll.u32 %s1, 4
      %s35 = int_to_ptr.vmem [resolvable:$true] %s34
      %37 = dma.vmem_to_smem %s35, 128, [#allocation7], [#allocation6]
    $region9: #{tpu_custom_call.1} parent=1 // pred_fallthru
      _
    // Predicated region
    $region10: #{tpu_custom_call.1} parent=1 // pred_check
      _
    $region11: #{tpu_custom_call.1} parent=1 // pred_check_branch
      %39 = sbr.rel (0) target = $region13
    $region12: #{tpu_custom_call.1} parent=1 // pred_region
      %s41 = ssub.s32 16, 16
      %42 = vsyncadd [#allocation9], %s41
      %s44 = sshll.u32 %s2, 4
      %s45 = int_to_ptr.vmem [resolvable:$true] %s44
      %47 = dma.vmem_to_smem %s45, 16, [#allocation8], [#allocation9]
    $region13: #{tpu_custom_call.1} parent=1 // pred_fallthru
      _
    // Predicated region
    $region14: #{tpu_custom_call.1} parent=1 // pred_check
      _
    $region15: #{tpu_custom_call.1} parent=1 // pred_check_branch
      %49 = sbr.rel (0) target = $region17
    $region16: #{tpu_custom_call.1} parent=1 // pred_region
      %50 = dma.done [#allocation4], 256
    $region17: #{tpu_custom_call.1} parent=1 // pred_fallthru
      _
    // Predicated region
    $region18: #{tpu_custom_call.1} parent=1 // pred_check
      _
    $region19: #{tpu_custom_call.1} parent=1 // pred_check_branch
      %52 = sbr.rel (0) target = $region21
    $region20: #{tpu_custom_call.1} parent=1 // pred_region
      %53 = dma.done [#allocation6], 128
    $region21: #{tpu_custom_call.1} parent=1 // pred_fallthru
      _
    // Predicated region
    $region22: #{tpu_custom_call.1} parent=1 // pred_check
      _
    $region23: #{tpu_custom_call.1} parent=1 // pred_check_branch
      %55 = sbr.rel (0) target = $region25
    $region24: #{tpu_custom_call.1} parent=1 // pred_region
      %56 = dma.done [#allocation9], 16
    $region25: #{tpu_custom_call.1} parent=1 // pred_fallthru
      _
    %57 = sfence
    %s58 = sadd.s32 0, 0
    %s59 = smul.u32 2, %s58
    %p60 = scmp.eq.s32.totalorder 0, 0
    // Predicated region
    $region26: #{tpu_custom_call.1} parent=1 // pred_check
      %p61 = pneg %p60
    $region27: #{tpu_custom_call.1} parent=1 // pred_check_branch
      %63 = sbr.rel (%p61) target = $region29
    $region28: #{tpu_custom_call.1} parent=1 // pred_region
      %64 = vst [vmem:[#allocation2] sm:$0x3] 0.0
      %65 = vst [vmem:[#allocation2 + $0x2] sm:$0x3] 0.0
      %66 = vst [vmem:[#allocation2 + $0x4] sm:$0x3] 0.0
      %67 = vst [vmem:[#allocation2 + $0x6] sm:$0x3] 0.0
      %68 = vst [vmem:[#allocation2 + $0x8] sm:$0x3] 0.0
      %69 = vst [vmem:[#allocation2 + $0xa] sm:$0x3] 0.0
      %70 = vst [vmem:[#allocation2 + $0xc] sm:$0x3] 0.0
      %71 = vst [vmem:[#allocation2 + $0xe] sm:$0x3] 0.0
    $region29: #{tpu_custom_call.1} parent=1 // pred_fallthru
      _
    %s72 = sld [smem:[#allocation7]]
    %s73 = sld [smem:[#allocation7 + $0x1]]
    %s74 = sld [smem:[#allocation7 + $0x2]]
    %s75 = sld [smem:[#allocation7 + $0x3]]
    %s76 = sld [smem:[#allocation7 + $0x80]]
    %s77 = sld [smem:[#allocation7 + $0x81]]
    %s78 = sld [smem:[#allocation7 + $0x82]]
    %s79 = sld [smem:[#allocation7 + $0x83]]
    %s80 = sld [smem:[#allocation7 + $0x100]]
    %s81 = sld [smem:[#allocation7 + $0x101]]
    %s82 = sld [smem:[#allocation7 + $0x102]]
    %s83 = sld [smem:[#allocation7 + $0x103]]
    %s84 = sld [smem:[#allocation7 + $0x180]]
    %s85 = sld [smem:[#allocation7 + $0x181]]
    %s86 = sld [smem:[#allocation7 + $0x182]]
    %s87 = sld [smem:[#allocation7 + $0x183]]
    %s88 = sld [smem:[#allocation7 + $0x200]]
    %s89 = sld [smem:[#allocation7 + $0x201]]
    %s90 = sld [smem:[#allocation7 + $0x202]]
    %s91 = sld [smem:[#allocation7 + $0x203]]
    %s92 = sld [smem:[#allocation7 + $0x280]]
    %s93 = sld [smem:[#allocation7 + $0x281]]
    %s94 = sld [smem:[#allocation7 + $0x282]]
    %s95 = sld [smem:[#allocation7 + $0x283]]
    %s96 = sld [smem:[#allocation7 + $0x300]]
    %s97 = sld [smem:[#allocation7 + $0x301]]
    %s98 = sld [smem:[#allocation7 + $0x302]]
    %s99 = sld [smem:[#allocation7 + $0x303]]
    %s100 = sld [smem:[#allocation7 + $0x380]]
    %s101 = sld [smem:[#allocation7 + $0x381]]
    %s102 = sld [smem:[#allocation7 + $0x382]]
    %s103 = sld [smem:[#allocation7 + $0x383]]
    %s104 = sld [smem:[#allocation8]]
    %s105 = sld [smem:[#allocation8 + $0x1]]
    %s106 = sld [smem:[#allocation8 + $0x2]]
    %s107 = sld [smem:[#allocation8 + $0x3]]
    %s108 = sld [smem:[#allocation8 + $0x4]]
    %s109 = sld [smem:[#allocation8 + $0x5]]
    %s110 = sld [smem:[#allocation8 + $0x6]]
    %s111 = sld [smem:[#allocation8 + $0x7]]
    %v112 = vld [vmem:[#allocation3] sm:$0x3]
    %s113 = sadd.s32 0, 2
    %s114 = smul.addr %s113, 2
    %s115 = scalar_lea.vmem [#allocation3], %s114
    %v116 = vld [vmem:[%s115] sm:$0x3]
    %s117 = sadd.s32 0, 4
    %s118 = smul.addr %s117, 2
    %s119 = scalar_lea.vmem [#allocation3], %s118
    %v120 = vld [vmem:[%s119] sm:$0x3]
    %s121 = sadd.s32 0, 6
    %s122 = smul.addr %s121, 2
    %s123 = scalar_lea.vmem [#allocation3], %s122
    %v124 = vld [vmem:[%s123] sm:$0x3]
    %v125 = vstv %s72
    %v126 = vmul.f32 %v112, %v125
    %v127 = vstv %s73
    %v128 = vmul.f32 %v116, %v127
    %v129 = vadd.f32 %v126, %v128
    %v130 = vstv %s74
    %v131 = vmul.f32 %v120, %v130
    %v132 = vadd.f32 %v129, %v131
    %v133 = vstv %s75
    %v134 = vmul.f32 %v124, %v133
    %v135 = vadd.f32 %v132, %v134
    %v136 = vstv %s104
    %v137 = vadd.f32 %v135, %v136
    %v138 = vstv %s76
    %v139 = vmul.f32 %v112, %v138
    %v140 = vstv %s77
    %v141 = vmul.f32 %v116, %v140
    %v142 = vadd.f32 %v139, %v141
    %v143 = vstv %s78
    %v144 = vmul.f32 %v120, %v143
    %v145 = vadd.f32 %v142, %v144
    %v146 = vstv %s79
    %v147 = vmul.f32 %v124, %v146
    %v148 = vadd.f32 %v145, %v147
    %v149 = vstv %s105
    %v150 = vadd.f32 %v148, %v149
    %v151 = vstv %s80
    %v152 = vmul.f32 %v112, %v151
    %v153 = vstv %s81
    %v154 = vmul.f32 %v116, %v153
    %v155 = vadd.f32 %v152, %v154
    %v156 = vstv %s82
    %v157 = vmul.f32 %v120, %v156
    %v158 = vadd.f32 %v155, %v157
    %v159 = vstv %s83
    %v160 = vmul.f32 %v124, %v159
    %v161 = vadd.f32 %v158, %v160
    %v162 = vstv %s106
    %v163 = vadd.f32 %v161, %v162
    %v164 = vstv %s84
    %v165 = vmul.f32 %v112, %v164
    %v166 = vstv %s85
    %v167 = vmul.f32 %v116, %v166
    %v168 = vadd.f32 %v165, %v167
    %v169 = vstv %s86
    %v170 = vmul.f32 %v120, %v169
    %v171 = vadd.f32 %v168, %v170
    %v172 = vstv %s87
    %v173 = vmul.f32 %v124, %v172
    %v174 = vadd.f32 %v171, %v173
    %v175 = vstv %s107
    %v176 = vadd.f32 %v174, %v175
    %v177 = vstv %s88
    %v178 = vmul.f32 %v112, %v177
    %v179 = vstv %s89
    %v180 = vmul.f32 %v116, %v179
    %v181 = vadd.f32 %v178, %v180
    %v182 = vstv %s90
    %v183 = vmul.f32 %v120, %v182
    %v184 = vadd.f32 %v181, %v183
    %v185 = vstv %s91
    %v186 = vmul.f32 %v124, %v185
    %v187 = vadd.f32 %v184, %v186
    %v188 = vstv %s108
    %v189 = vadd.f32 %v187, %v188
    %v190 = vstv %s92
    %v191 = vmul.f32 %v112, %v190
    %v192 = vstv %s93
    %v193 = vmul.f32 %v116, %v192
    %v194 = vadd.f32 %v191, %v193
    %v195 = vstv %s94
    %v196 = vmul.f32 %v120, %v195
    %v197 = vadd.f32 %v194, %v196
    %v198 = vstv %s95
    %v199 = vmul.f32 %v124, %v198
    %v200 = vadd.f32 %v197, %v199
    %v201 = vstv %s109
    %v202 = vadd.f32 %v200, %v201
    %v203 = vstv %s96
    %v204 = vmul.f32 %v112, %v203
    %v205 = vstv %s97
    %v206 = vmul.f32 %v116, %v205
    %v207 = vadd.f32 %v204, %v206
    %v208 = vstv %s98
    %v209 = vmul.f32 %v120, %v208
    %v210 = vadd.f32 %v207, %v209
    %v211 = vstv %s99
    %v212 = vmul.f32 %v124, %v211
    %v213 = vadd.f32 %v210, %v212
    %v214 = vstv %s110
    %v215 = vadd.f32 %v213, %v214
    %v216 = vstv %s100
    %v217 = vmul.f32 %v112, %v216
    %v218 = vstv %s101
    %v219 = vmul.f32 %v116, %v218
    %v220 = vadd.f32 %v217, %v219
    %v221 = vstv %s102
    %v222 = vmul.f32 %v120, %v221
    %v223 = vadd.f32 %v220, %v222
    %v224 = vstv %s103
    %v225 = vmul.f32 %v124, %v224
    %v226 = vadd.f32 %v223, %v225
    %v227 = vstv %s111
    %v228 = vadd.f32 %v226, %v227
    %v229 = vsub.f32 %v137, %v176
    %v230 = vmul.f32 %v229, 1.442695
    %v231 = vpow.pop %v230
    %v232 = vadd.f32 %v231, 1.0
    %v233 = vsub.f32 %v150, %v176
    %v234 = vmul.f32 %v233, 1.442695
    %v235 = vpow.pop %v234
    %v236 = vadd.f32 %v232, %v235
    %v237 = vsub.f32 %v163, %v176
    %v238 = vmul.f32 %v237, 1.442695
    %v239 = vpow.pop %v238
    %v240 = vadd.f32 %v236, %v239
    %v241 = vsub.f32 %v189, %v176
    %v242 = vmul.f32 %v241, 1.442695
    %v243 = vpow.pop %v242
    %v244 = vadd.f32 %v240, %v243
    %v245 = vsub.f32 %v202, %v176
    %v246 = vmul.f32 %v245, 1.442695
    %v247 = vpow.pop %v246
    %v248 = vadd.f32 %v244, %v247
    %v249 = vsub.f32 %v215, %v176
    %v250 = vmul.f32 %v249, 1.442695
    %v251 = vpow.pop %v250
    %v252 = vadd.f32 %v248, %v251
    %v253 = vsub.f32 %v228, %v176
    %v254 = vmul.f32 %v253, 1.442695
    %v255 = vpow.pop %v254
    %v256 = vadd.f32 %v252, %v255
    %v257 = vmul.f32 %v256, 0.25
    %vm258 = vcmp.lt.f32.partialorder %v257, 1.0
    %v259 = vsel %vm258, %v137, 0.0
    %v260 = vadd.f32 %v259, 0.0
    %v261 = vsel %vm258, %v150, 0.0
    %v262 = vadd.f32 %v261, 0.0
    %v263 = vsel %vm258, %v163, 0.0
    %v264 = vadd.f32 %v263, 0.0
    %v265 = vsel %vm258, %v176, 0.0
    %v266 = vadd.f32 %v265, 0.0
    %v267 = vsel %vm258, %v189, 0.0
    %v268 = vadd.f32 %v267, 0.0
    %v269 = vsel %vm258, %v202, 0.0
    %v270 = vadd.f32 %v269, 0.0
    %v271 = vsel %vm258, %v215, 0.0
    %v272 = vadd.f32 %v271, 0.0
    %v273 = vsel %vm258, %v228, 0.0
    %v274 = vadd.f32 %v273, 0.0
    %s275 = scalar_lea.vmem [#allocation3], 2
    %v276 = vld [vmem:[%s275] sm:$0x3]
    %s277 = sadd.s32 1, 2
    %s278 = smul.addr %s277, 2
    %s279 = scalar_lea.vmem [#allocation3], %s278
    %v280 = vld [vmem:[%s279] sm:$0x3]
    %s281 = sadd.s32 1, 4
    %s282 = smul.addr %s281, 2
    %s283 = scalar_lea.vmem [#allocation3], %s282
    %v284 = vld [vmem:[%s283] sm:$0x3]
    %s285 = sadd.s32 1, 6
    %s286 = smul.addr %s285, 2
    %s287 = scalar_lea.vmem [#allocation3], %s286
    %v288 = vld [vmem:[%s287] sm:$0x3]
    %v289 = vmul.f32 %v276, %v125
    %v290 = vmul.f32 %v280, %v127
    %v291 = vadd.f32 %v289, %v290
    %v292 = vmul.f32 %v284, %v130
    %v293 = vadd.f32 %v291, %v292
    %v294 = vmul.f32 %v288, %v133
    %v295 = vadd.f32 %v293, %v294
    %v296 = vadd.f32 %v295, %v136
    %v297 = vmul.f32 %v276, %v138
    %v298 = vmul.f32 %v280, %v140
    %v299 = vadd.f32 %v297, %v298
    %v300 = vmul.f32 %v284, %v143
    %v301 = vadd.f32 %v299, %v300
    %v302 = vmul.f32 %v288, %v146
    %v303 = vadd.f32 %v301, %v302
    %v304 = vadd.f32 %v303, %v149
    %v305 = vmul.f32 %v276, %v151
    %v306 = vmul.f32 %v280, %v153
    %v307 = vadd.f32 %v305, %v306
    %v308 = vmul.f32 %v284, %v156
    %v309 = vadd.f32 %v307, %v308
    %v310 = vmul.f32 %v288, %v159
    %v311 = vadd.f32 %v309, %v310
    %v312 = vadd.f32 %v311, %v162
    %v313 = vmul.f32 %v276, %v164
    %v314 = vmul.f32 %v280, %v166
    %v315 = vadd.f32 %v313, %v314
    %v316 = vmul.f32 %v284, %v169
    %v317 = vadd.f32 %v315, %v316
    %v318 = vmul.f32 %v288, %v172
    %v319 = vadd.f32 %v317, %v318
    %v320 = vadd.f32 %v319, %v175
    %v321 = vmul.f32 %v276, %v177
    %v322 = vmul.f32 %v280, %v179
    %v323 = vadd.f32 %v321, %v322
    %v324 = vmul.f32 %v284, %v182
    %v325 = vadd.f32 %v323, %v324
    %v326 = vmul.f32 %v288, %v185
    %v327 = vadd.f32 %v325, %v326
    %v328 = vadd.f32 %v327, %v188
    %v329 = vmul.f32 %v276, %v190
    %v330 = vmul.f32 %v280, %v192
    %v331 = vadd.f32 %v329, %v330
    %v332 = vmul.f32 %v284, %v195
    %v333 = vadd.f32 %v331, %v332
    %v334 = vmul.f32 %v288, %v198
    %v335 = vadd.f32 %v333, %v334
    %v336 = vadd.f32 %v335, %v201
    %v337 = vmul.f32 %v276, %v203
    %v338 = vmul.f32 %v280, %v205
    %v339 = vadd.f32 %v337, %v338
    %v340 = vmul.f32 %v284, %v208
    %v341 = vadd.f32 %v339, %v340
    %v342 = vmul.f32 %v288, %v211
    %v343 = vadd.f32 %v341, %v342
    %v344 = vadd.f32 %v343, %v214
    %v345 = vmul.f32 %v276, %v216
    %v346 = vmul.f32 %v280, %v218
    %v347 = vadd.f32 %v345, %v346
    %v348 = vmul.f32 %v284, %v221
    %v349 = vadd.f32 %v347, %v348
    %v350 = vmul.f32 %v288, %v224
    %v351 = vadd.f32 %v349, %v350
    %v352 = vadd.f32 %v351, %v227
    %v353 = vsub.f32 %v296, %v320
    %v354 = vmul.f32 %v353, 1.442695
    %v355 = vpow.pop %v354
    %v356 = vadd.f32 %v355, 1.0
    %v357 = vsub.f32 %v304, %v320
    %v358 = vmul.f32 %v357, 1.442695
    %v359 = vpow.pop %v358
    %v360 = vadd.f32 %v356, %v359
    %v361 = vsub.f32 %v312, %v320
    %v362 = vmul.f32 %v361, 1.442695
    %v363 = vpow.pop %v362
    %v364 = vadd.f32 %v360, %v363
    %v365 = vsub.f32 %v328, %v320
    %v366 = vmul.f32 %v365, 1.442695
    %v367 = vpow.pop %v366
    %v368 = vadd.f32 %v364, %v367
    %v369 = vsub.f32 %v336, %v320
    %v370 = vmul.f32 %v369, 1.442695
    %v371 = vpow.pop %v370
    %v372 = vadd.f32 %v368, %v371
    %v373 = vsub.f32 %v344, %v320
    %v374 = vmul.f32 %v373, 1.442695
    %v375 = vpow.pop %v374
    %v376 = vadd.f32 %v372, %v375
    %v377 = vsub.f32 %v352, %v320
    %v378 = vmul.f32 %v377, 1.442695
    %v379 = vpow.pop %v378
    %v380 = vadd.f32 %v376, %v379
    %v381 = vmul.f32 %v380, 0.25
    %vm382 = vcmp.lt.f32.partialorder %v381, 1.0
    %v383 = vsel %vm382, %v296, 0.0
    %v384 = vadd.f32 %v260, %v383
    %v385 = vsel %vm382, %v304, 0.0
    %v386 = vadd.f32 %v262, %v385
    %v387 = vsel %vm382, %v312, 0.0
    %v388 = vadd.f32 %v264, %v387
    %v389 = vsel %vm382, %v320, 0.0
    %v390 = vadd.f32 %v266, %v389
    %v391 = vsel %vm382, %v328, 0.0
    %v392 = vadd.f32 %v268, %v391
    %v393 = vsel %vm382, %v336, 0.0
    %v394 = vadd.f32 %v270, %v393
    %v395 = vsel %vm382, %v344, 0.0
    %v396 = vadd.f32 %v272, %v395
    %v397 = vsel %vm382, %v352, 0.0
    %v398 = vadd.f32 %v274, %v397
    %v399 = vld [vmem:[#allocation2] sm:$0x3]
    %v400 = vadd.f32 %v399, %v384
    %401 = vst [vmem:[#allocation2] sm:$0x3] %v400
    %s402 = scalar_lea.vmem [#allocation2], 2
    %v403 = vld [vmem:[%s402] sm:$0x3]
    %v404 = vadd.f32 %v403, %v386
    %405 = vst [vmem:[%s402] sm:$0x3] %v404
    %s406 = scalar_lea.vmem [#allocation2], 4
    %v407 = vld [vmem:[%s406] sm:$0x3]
    %v408 = vadd.f32 %v407, %v388
    %409 = vst [vmem:[%s406] sm:$0x3] %v408
    %s410 = scalar_lea.vmem [#allocation2], 6
    %v411 = vld [vmem:[%s410] sm:$0x3]
    %v412 = vadd.f32 %v411, %v390
    %413 = vst [vmem:[%s410] sm:$0x3] %v412
    %s414 = scalar_lea.vmem [#allocation2], 8
    %v415 = vld [vmem:[%s414] sm:$0x3]
    %v416 = vadd.f32 %v415, %v392
    %417 = vst [vmem:[%s414] sm:$0x3] %v416
    %s418 = scalar_lea.vmem [#allocation2], 10
    %v419 = vld [vmem:[%s418] sm:$0x3]
    %v420 = vadd.f32 %v419, %v394
    %421 = vst [vmem:[%s418] sm:$0x3] %v420
    %s422 = scalar_lea.vmem [#allocation2], 12
    %v423 = vld [vmem:[%s422] sm:$0x3]
    %v424 = vadd.f32 %v423, %v396
    %425 = vst [vmem:[%s422] sm:$0x3] %v424
    %s426 = scalar_lea.vmem [#allocation2], 14
    %v427 = vld [vmem:[%s426] sm:$0x3]
    %v428 = vadd.f32 %v427, %v398
    %429 = vst [vmem:[%s426] sm:$0x3] %v428
    // Predicated region
    $region30: #{tpu_custom_call.1} parent=1 // pred_check
      %p430 = pneg %p60
    $region31: #{tpu_custom_call.1} parent=1 // pred_check_branch
      %432 = sbr.rel (%p430) target = $region33
    $region32: #{tpu_custom_call.1} parent=1 // pred_region
      %v433 = vld [vmem:[#allocation2] sm:$0x3]
      %vm434 = vcmask 1041408
      %v435 = vsel %vm434, %v433, 0.0
      %436 = vadd.xlane.f32.xlu0 %v435
      %v437 = vpop.xlane.xlu0 %436
      %v438 = vmul.f32 %v437, 0.00390625
      %vm439 = vcmask 1024
      %440 = vst.msk [vmem:[#allocation10] sm:$0x3] %vm439, %v438
      %v441 = vld [vmem:[%s402] sm:$0x3]
      %v442 = vsel %vm434, %v441, 0.0
      %443 = vadd.xlane.f32.xlu0 %v442
      %v444 = vpop.xlane.xlu0 %443
      %v445 = vmul.f32 %v444, 0.00390625
      %vm446 = vcmask 9224
      %447 = vst.msk [vmem:[#allocation10] sm:$0x3] %vm446, %v445
      %v448 = vld [vmem:[%s406] sm:$0x3]
      %v449 = vsel %vm434, %v448, 0.0
      %450 = vadd.xlane.f32.xlu0 %v449
      %v451 = vpop.xlane.xlu0 %450
      %v452 = vmul.f32 %v451, 0.00390625
      %vm453 = vcmask 17424
      %454 = vst.msk [vmem:[#allocation10] sm:$0x3] %vm453, %v452
      %v455 = vld [vmem:[%s410] sm:$0x3]
      %v456 = vsel %vm434, %v455, 0.0
      %457 = vadd.xlane.f32.xlu0 %v456
      %v458 = vpop.xlane.xlu0 %457
      %v459 = vmul.f32 %v458, 0.00390625
      %vm460 = vcmask 25624
      %461 = vst.msk [vmem:[#allocation10] sm:$0x3] %vm460, %v459
      %v462 = vld [vmem:[%s414] sm:$0x3]
      %v463 = vsel %vm434, %v462, 0.0
      %464 = vadd.xlane.f32.xlu0 %v463
      %v465 = vpop.xlane.xlu0 %464
      %v466 = vmul.f32 %v465, 0.00390625
      %vm467 = vcmask 33824
      %468 = vst.msk [vmem:[#allocation10] sm:$0x3] %vm467, %v466
      %v469 = vld [vmem:[%s418] sm:$0x3]
      %v470 = vsel %vm434, %v469, 0.0
      %471 = vadd.xlane.f32.xlu0 %v470
      %v472 = vpop.xlane.xlu0 %471
      %v473 = vmul.f32 %v472, 0.00390625
      %vm474 = vcmask 42024
      %475 = vst.msk [vmem:[#allocation10] sm:$0x3] %vm474, %v473
      %v476 = vld [vmem:[%s422] sm:$0x3]
      %v477 = vsel %vm434, %v476, 0.0
      %478 = vadd.xlane.f32.xlu0 %v477
      %v479 = vpop.xlane.xlu0 %478
      %v480 = vmul.f32 %v479, 0.00390625
      %vm481 = vcmask 50224
      %482 = vst.msk [vmem:[#allocation10] sm:$0x3] %vm481, %v480
      %v483 = vld [vmem:[%s426] sm:$0x3]
      %v484 = vsel %vm434, %v483, 0.0
      %485 = vadd.xlane.f32.xlu0 %v484
      %v486 = vpop.xlane.xlu0 %485
      %v487 = vmul.f32 %v486, 0.00390625
      %vm488 = vcmask 58424
      %489 = vst.msk [vmem:[#allocation10] sm:$0x3] %vm488, %v487
    $region33: #{tpu_custom_call.1} parent=1 // pred_fallthru
      _
    // Predicated region
    $region34: #{tpu_custom_call.1} parent=1 // pred_check
      _
    $region35: #{tpu_custom_call.1} parent=1 // pred_check_branch
      %491 = sbr.rel (0) target = $region37
    $region36: #{tpu_custom_call.1} parent=1 // pred_region
      %s493 = ssub.s32 32, 32
      %494 = vsyncadd [#allocation5], %s493
      %s496 = sshll.u32 [#allocation10], 4
      %s497 = int_to_ptr.vmem [resolvable:$true] %s496
      %499 = dma.vmem_to_hbm [thread:$0]  %s497, 32, %s3, [#allocation5]
    $region37: #{tpu_custom_call.1} parent=1 // pred_fallthru
      _
    // Predicated region
    $region38: #{tpu_custom_call.1} parent=1 // pred_check
      _
    $region39: #{tpu_custom_call.1} parent=1 // pred_check_branch
      %501 = sbr.rel (0) target = $region41
    $region40: #{tpu_custom_call.1} parent=1 // pred_region
      %502 = dma.done [#allocation5], 32
    $region41: #{tpu_custom_call.1} parent=1 // pred_fallthru
      _
    %503 = vsyncpa [#allocation4], 1
    %504 = vsyncpa [#allocation5], 1
    %505 = vsyncpa [#allocation6], 1
    %506 = vsyncpa [#allocation9], 1

</llo_original>
